<compile_context>
chip_gen: v7x
topology: tpu7x:2x2x1
jax: 0.10.0
libtpu: 0.0.40
codegen_flags: <defaults>
</compile_context>

<pallas_src>
import functools

import jax
import jax.numpy as jnp
from jax import lax
from jax.experimental import pallas as pl
from jax.experimental.pallas import tpu as pltpu


def _sigmoid(x):
    # exp and the approximate reciprocal both execute on the EUP slot.
    return pl.reciprocal(1.0 + jnp.exp(-x), approx=True)


def _conv3x3_taps(pad_ref, w_ref, b_ref, *, cin, cout, H, W):
    """3x3 'SAME' cross-correlation (== Conv2d(k=3, padding=1)) on the VPU.

    pad_ref: VMEM scratch (cin, H+2, W+2), zero border, input in the interior.
    w_ref:   SMEM (cout*cin*9,) f32, flattened OIHW weights.
    b_ref:   SMEM (cout,) f32 biases.
    Returns a list of `cout` (H, W) f32 planes.
    """
    accs = [jnp.zeros((H, W), jnp.float32) + b_ref[o] for o in range(cout)]
    for i in range(cin):
        for di in range(3):
            for dj in range(3):
                tap = pad_ref[i, di:di + H, dj:dj + W]      # (H, W), read once
                for o in range(cout):
                    w = w_ref[((o * cin + i) * 3 + di) * 3 + dj]
                    accs[o] = accs[o] + w * tap
    return accs


def _inv_block_kernel(x_ref, wef_ref, bef_ref, whg_ref, bhg_ref,
                      y_ref, pad2_ref, pad1_ref, *, c1, c2, clamp):
    # x_ref / y_ref: (C, H, W) block for one batch element (leading dim squeezed)
    H, W = x_ref.shape[1], x_ref.shape[2]

    # ---- pad x2 once; shared by the fused E|F conv ----
    pad2_ref[...] = jnp.zeros_like(pad2_ref)
    pad2_ref[:, 1:H + 1, 1:W + 1] = x_ref[c1:, :, :]

    ef = _conv3x3_taps(pad2_ref, wef_ref, bef_ref,
                       cin=c2, cout=2 * c1, H=H, W=W)   # [E(x2) | F(x2)]

    # y1 = x1 + E(x2) - F(x2)
    y1 = [x_ref[o, :, :] + ef[o] - ef[c1 + o] for o in range(c1)]

    # ---- pad y1 once; shared by the fused H|G conv; also store y1 ----
    pad1_ref[...] = jnp.zeros_like(pad1_ref)
    for o in range(c1):
        pad1_ref[o, 1:H + 1, 1:W + 1] = y1[o]
        y_ref[o, :, :] = y1[o]

    hg = _conv3x3_taps(pad1_ref, whg_ref, bhg_ref,
                       cin=c1, cout=2 * c2, H=H, W=W)   # [H(y1) | G(y1)]

    # y2 = x2 * exp(clamp*(2*sigmoid(H(y1)) - 1)) + G(y1)
    for o in range(c2):
        s = clamp * (2.0 * _sigmoid(hg[o]) - 1.0)
        y_ref[c1 + o, :, :] = x_ref[c1 + o, :, :] * jnp.exp(s) + hg[c2 + o]


def enhanced_inv_block(x, params, clamp=1.0):
    """Forward of EnhancedInvBlock (rev=False). x: (N, C, H, W) NCHW.

    params: PyTorch-layout weights wE/wF (C1, C2, 3, 3), wH/wG (C2, C1, 3, 3),
            biases bE/bF (C1,), bH/bG (C2,).
    """
    N, C, H, W = x.shape
    C1 = params["wE"].shape[0]
    C2 = C - C1

    # Fuse E|F and H|G along the output-channel axis; flatten OIHW for SMEM.
    w_ef = jnp.concatenate([params["wE"], params["wF"]], axis=0)
    w_hg = jnp.concatenate([params["wH"], params["wG"]], axis=0)
    w_ef = w_ef.reshape(-1).astype(jnp.float32)
    w_hg = w_hg.reshape(-1).astype(jnp.float32)
    b_ef = jnp.concatenate([params["bE"], params["bF"]], axis=0).astype(jnp.float32)
    b_hg = jnp.concatenate([params["bH"], params["bG"]], axis=0).astype(jnp.float32)

    kernel = functools.partial(_inv_block_kernel, c1=C1, c2=C2, clamp=float(clamp))

    smem_spec = pl.BlockSpec(memory_space=pltpu.MemorySpace.SMEM)
    y = pl.pallas_call(
        kernel,
        grid=(N,),
        out_shape=jax.ShapeDtypeStruct((N, C, H, W), jnp.float32),
        in_specs=[
            pl.BlockSpec((None, C, H, W), lambda n: (n, 0, 0, 0)),   # x block
            smem_spec,   # w_ef (flat)
            smem_spec,   # b_ef
            smem_spec,   # w_hg (flat)
            smem_spec,   # b_hg
        ],
        out_specs=pl.BlockSpec((None, C, H, W), lambda n: (n, 0, 0, 0)),
        scratch_shapes=[
            pltpu.VMEM((C2, H + 2, W + 2), jnp.float32),   # padded x2
            pltpu.VMEM((C1, H + 2, W + 2), jnp.float32),   # padded y1
        ],
        compiler_params=pltpu.CompilerParams(
            dimension_semantics=("parallel",)),
    )(x.astype(jnp.float32), w_ef, b_ef, w_hg, b_hg)
    return y


# ---------------- pure-JAX reference (correctness check only) ----------------
def _ref_conv(x, w, b):
    y = lax.conv_general_dilated(x, w, window_strides=(1, 1), padding="SAME",
                                 dimension_numbers=("NCHW", "OIHW", "NCHW"))
    return y + b.reshape(1, -1, 1, 1)


def enhanced_inv_block_ref(x, params, clamp=1.0):
    C1 = params["wE"].shape[0]
    x = x.astype(jnp.float32)
    x1, x2 = x[:, :C1], x[:, C1:]
    lr = x1 + _ref_conv(x2, params["wE"], params["bE"])
    y1 = lr - _ref_conv(x2, params["wF"], params["bF"])
    s = clamp * (jax.nn.sigmoid(_ref_conv(y1, params["wH"], params["bH"])) * 2 - 1)
    y2 = x2 * jnp.exp(s) + _ref_conv(y1, params["wG"], params["bG"])
    return jnp.concatenate([y1, y2], axis=1)


if __name__ == "__main__":
    import numpy as np

    key = jax.random.PRNGKey(0)
    N, C, H, W = 2, 4, 16, 16       # channel_num=4
    C1 = 2                          # channel_split_num=2 -> split_len1=2, split_len2=2
    C2 = C - C1

    ks = jax.random.split(key, 9)
    x = jax.random.normal(ks[0], (N, C, H, W), jnp.float32)
    params = {
        # subnet = Conv2d(k=3, padding=1); PyTorch OIHW layout
        "wE": 0.1 * jax.random.normal(ks[1], (C1, C2, 3, 3), jnp.float32),
        "bE": 0.1 * jax.random.normal(ks[2], (C1,), jnp.float32),
        "wF": 0.1 * jax.random.normal(ks[3], (C1, C2, 3, 3), jnp.float32),
        "bF": 0.1 * jax.random.normal(ks[4], (C1,), jnp.float32),
        "wH": 0.1 * jax.random.normal(ks[5], (C2, C1, 3, 3), jnp.float32),
        "bH": 0.1 * jax.random.normal(ks[6], (C2,), jnp.float32),
        "wG": 0.1 * jax.random.normal(ks[7], (C2, C1, 3, 3), jnp.float32),
        "bG": 0.1 * jax.random.normal(ks[8], (C2,), jnp.float32),
    }

    out = jax.block_until_ready(enhanced_inv_block(x, params, clamp=1.0))
    assert out.shape == (N, C, H, W)

    ref = enhanced_inv_block_ref(x, params, clamp=1.0)
    np.testing.assert_allclose(np.asarray(out), np.asarray(ref),
                               atol=5e-3, rtol=5e-3)

    print("KERNEL_OK")
</pallas_src>

<mosaic_0001>
module attributes {stable_mosaic.version = 11 : i64} {
  func.func @_inv_block_kernel(%arg0: i32, %arg1: memref<1x4x16x16xf32, #tpu.memory_space<vmem>>, %arg2: memref<72xf32, #tpu.memory_space<smem>>, %arg3: memref<4xf32, #tpu.memory_space<smem>>, %arg4: memref<72xf32, #tpu.memory_space<smem>>, %arg5: memref<4xf32, #tpu.memory_space<smem>>, %arg6: memref<1x4x16x16xf32, #tpu.memory_space<vmem>>, %arg7: memref<2x18x18xf32, #tpu.memory_space<vmem>>, %arg8: memref<2x18x18xf32, #tpu.memory_space<vmem>>) attributes {dimension_semantics = [#tpu.dimension_semantics<parallel>], iteration_bounds = array<i64: 2>, scalar_prefetch = 0 : i64, scratch_operands = 2 : i64, tpu.core_type = #tpu.core_type<tc>, window_params = [{transform_indices = @transform_0, window_bounds = array<i64: 1, 4, 16, 16>}, {transform_indices = @transform_1, window_bounds = array<i64: 72>}, {transform_indices = @transform_2, window_bounds = array<i64: 4>}, {transform_indices = @transform_3, window_bounds = array<i64: 72>}, {transform_indices = @transform_4, window_bounds = array<i64: 4>}, {transform_indices = @transform_5, window_bounds = array<i64: 1, 4, 16, 16>}]} {
    %cst = arith.constant 0.000000e+00 : f32
    %0 = vector.broadcast %cst : f32 to vector<2x18x18xf32>
    %c0 = arith.constant 0 : index
    %c0_0 = arith.constant 0 : index
    %c0_1 = arith.constant 0 : index
    %1 = vector.load %arg7[%c0, %c0_0, %c0_1] : memref<2x18x18xf32, #tpu.memory_space<vmem>>, vector<2x18x18xf32>
    tpu.vector_store %arg7[%c0, %c0_0, %c0_1], %0 {strides = array<i32>} : memref<2x18x18xf32, #tpu.memory_space<vmem>>, vector<2x18x18xf32>,
    %c0_2 = arith.constant 0 : index
    %c2 = arith.constant 2 : index
    %c0_3 = arith.constant 0 : index
    %c0_4 = arith.constant 0 : index
    %2 = vector.load %arg1[%c0_2, %c2, %c0_3, %c0_4] : memref<1x4x16x16xf32, #tpu.memory_space<vmem>>, vector<1x2x16x16xf32>
    %3 = vector.shape_cast %2 : vector<1x2x16x16xf32> to vector<2x16x16xf32>
    %c0_5 = arith.constant 0 : index
    %c1 = arith.constant 1 : index
    %c1_6 = arith.constant 1 : index
    %4 = vector.load %arg7[%c0_5, %c1, %c1_6] : memref<2x18x18xf32, #tpu.memory_space<vmem>>, vector<2x16x16xf32>
    tpu.vector_store %arg7[%c0_5, %c1, %c1_6], %3 {strides = array<i32>} : memref<2x18x18xf32, #tpu.memory_space<vmem>>, vector<2x16x16xf32>,
    %cst_7 = arith.constant 0.000000e+00 : f32
    %5 = vector.broadcast %cst_7 : f32 to vector<16x16xf32>
    %c0_8 = arith.constant 0 : index
    %6 = memref.load %arg3[%c0_8] : memref<4xf32, #tpu.memory_space<smem>>
    %7 = vector.broadcast %6 : f32 to vector<16x16xf32>
    %8 = arith.addf %5, %7 : vector<16x16xf32>
    %cst_9 = arith.constant 0.000000e+00 : f32
    %9 = vector.broadcast %cst_9 : f32 to vector<16x16xf32>
    %c1_10 = arith.constant 1 : index
    %10 = memref.load %arg3[%c1_10] : memref<4xf32, #tpu.memory_space<smem>>
    %11 = vector.broadcast %10 : f32 to vector<16x16xf32>
    %12 = arith.addf %9, %11 : vector<16x16xf32>
    %cst_11 = arith.constant 0.000000e+00 : f32
    %13 = vector.broadcast %cst_11 : f32 to vector<16x16xf32>
    %c2_12 = arith.constant 2 : index
    %14 = memref.load %arg3[%c2_12] : memref<4xf32, #tpu.memory_space<smem>>
    %15 = vector.broadcast %14 : f32 to vector<16x16xf32>
    %16 = arith.addf %13, %15 : vector<16x16xf32>
    %cst_13 = arith.constant 0.000000e+00 : f32
    %17 = vector.broadcast %cst_13 : f32 to vector<16x16xf32>
    %c3 = arith.constant 3 : index
    %18 = memref.load %arg3[%c3] : memref<4xf32, #tpu.memory_space<smem>>
    %19 = vector.broadcast %18 : f32 to vector<16x16xf32>
    %20 = arith.addf %17, %19 : vector<16x16xf32>
    %c0_14 = arith.constant 0 : index
    %c0_15 = arith.constant 0 : index
    %c0_16 = arith.constant 0 : index
    %21 = vector.load %arg7[%c0_14, %c0_15, %c0_16] : memref<2x18x18xf32, #tpu.memory_space<vmem>>, vector<1x16x16xf32>
    %22 = vector.shape_cast %21 : vector<1x16x16xf32> to vector<16x16xf32>
    %c0_17 = arith.constant 0 : index
    %23 = memref.load %arg2[%c0_17] : memref<72xf32, #tpu.memory_space<smem>>
    %24 = vector.broadcast %23 : f32 to vector<16x16xf32>
    %25 = arith.mulf %24, %22 : vector<16x16xf32>
    %26 = arith.addf %8, %25 : vector<16x16xf32>
    %c18 = arith.constant 18 : index
    %27 = memref.load %arg2[%c18] : memref<72xf32, #tpu.memory_space<smem>>
    %28 = vector.broadcast %27 : f32 to vector<16x16xf32>
    %29 = arith.mulf %28, %22 : vector<16x16xf32>
    %30 = arith.addf %12, %29 : vector<16x16xf32>
    %c36 = arith.constant 36 : index
    %31 = memref.load %arg2[%c36] : memref<72xf32, #tpu.memory_space<smem>>
    %32 = vector.broadcast %31 : f32 to vector<16x16xf32>
    %33 = arith.mulf %32, %22 : vector<16x16xf32>
    %34 = arith.addf %16, %33 : vector<16x16xf32>
    %c54 = arith.constant 54 : index
    %35 = memref.load %arg2[%c54] : memref<72xf32, #tpu.memory_space<smem>>
    %36 = vector.broadcast %35 : f32 to vector<16x16xf32>
    %37 = arith.mulf %36, %22 : vector<16x16xf32>
    %38 = arith.addf %20, %37 : vector<16x16xf32>
    %c0_18 = arith.constant 0 : index
    %c0_19 = arith.constant 0 : index
    %c1_20 = arith.constant 1 : index
    %39 = vector.load %arg7[%c0_18, %c0_19, %c1_20] : memref<2x18x18xf32, #tpu.memory_space<vmem>>, vector<1x16x16xf32>
    %40 = vector.shape_cast %39 : vector<1x16x16xf32> to vector<16x16xf32>
    %c1_21 = arith.constant 1 : index
    %41 = memref.load %arg2[%c1_21] : memref<72xf32, #tpu.memory_space<smem>>
    %42 = vector.broadcast %41 : f32 to vector<16x16xf32>
    %43 = arith.mulf %42, %40 : vector<16x16xf32>
    %44 = arith.addf %26, %43 : vector<16x16xf32>
    %c19 = arith.constant 19 : index
    %45 = memref.load %arg2[%c19] : memref<72xf32, #tpu.memory_space<smem>>
    %46 = vector.broadcast %45 : f32 to vector<16x16xf32>
    %47 = arith.mulf %46, %40 : vector<16x16xf32>
    %48 = arith.addf %30, %47 : vector<16x16xf32>
    %c37 = arith.constant 37 : index
    %49 = memref.load %arg2[%c37] : memref<72xf32, #tpu.memory_space<smem>>
    %50 = vector.broadcast %49 : f32 to vector<16x16xf32>
    %51 = arith.mulf %50, %40 : vector<16x16xf32>
    %52 = arith.addf %34, %51 : vector<16x16xf32>
    %c55 = arith.constant 55 : index
    %53 = memref.load %arg2[%c55] : memref<72xf32, #tpu.memory_space<smem>>
    %54 = vector.broadcast %53 : f32 to vector<16x16xf32>
    %55 = arith.mulf %54, %40 : vector<16x16xf32>
    %56 = arith.addf %38, %55 : vector<16x16xf32>
    %c0_22 = arith.constant 0 : index
    %c0_23 = arith.constant 0 : index
    %c2_24 = arith.constant 2 : index
    %57 = vector.load %arg7[%c0_22, %c0_23, %c2_24] : memref<2x18x18xf32, #tpu.memory_space<vmem>>, vector<1x16x16xf32>
    %58 = vector.shape_cast %57 : vector<1x16x16xf32> to vector<16x16xf32>
    %c2_25 = arith.constant 2 : index
    %59 = memref.load %arg2[%c2_25] : memref<72xf32, #tpu.memory_space<smem>>
    %60 = vector.broadcast %59 : f32 to vector<16x16xf32>
    %61 = arith.mulf %60, %58 : vector<16x16xf32>
    %62 = arith.addf %44, %61 : vector<16x16xf32>
    %c20 = arith.constant 20 : index
    %63 = memref.load %arg2[%c20] : memref<72xf32, #tpu.memory_space<smem>>
    %64 = vector.broadcast %63 : f32 to vector<16x16xf32>
    %65 = arith.mulf %64, %58 : vector<16x16xf32>
    %66 = arith.addf %48, %65 : vector<16x16xf32>
    %c38 = arith.constant 38 : index
    %67 = memref.load %arg2[%c38] : memref<72xf32, #tpu.memory_space<smem>>
    %68 = vector.broadcast %67 : f32 to vector<16x16xf32>
    %69 = arith.mulf %68, %58 : vector<16x16xf32>
    %70 = arith.addf %52, %69 : vector<16x16xf32>
    %c56 = arith.constant 56 : index
    %71 = memref.load %arg2[%c56] : memref<72xf32, #tpu.memory_space<smem>>
    %72 = vector.broadcast %71 : f32 to vector<16x16xf32>
    %73 = arith.mulf %72, %58 : vector<16x16xf32>
    %74 = arith.addf %56, %73 : vector<16x16xf32>
    %c0_26 = arith.constant 0 : index
    %c1_27 = arith.constant 1 : index
    %c0_28 = arith.constant 0 : index
    %75 = vector.load %arg7[%c0_26, %c1_27, %c0_28] : memref<2x18x18xf32, #tpu.memory_space<vmem>>, vector<1x16x16xf32>
    %76 = vector.shape_cast %75 : vector<1x16x16xf32> to vector<16x16xf32>
    %c3_29 = arith.constant 3 : index
    %77 = memref.load %arg2[%c3_29] : memref<72xf32, #tpu.memory_space<smem>>
    %78 = vector.broadcast %77 : f32 to vector<16x16xf32>
    %79 = arith.mulf %78, %76 : vector<16x16xf32>
    %80 = arith.addf %62, %79 : vector<16x16xf32>
    %c21 = arith.constant 21 : index
    %81 = memref.load %arg2[%c21] : memref<72xf32, #tpu.memory_space<smem>>
    %82 = vector.broadcast %81 : f32 to vector<16x16xf32>
    %83 = arith.mulf %82, %76 : vector<16x16xf32>
    %84 = arith.addf %66, %83 : vector<16x16xf32>
    %c39 = arith.constant 39 : index
    %85 = memref.load %arg2[%c39] : memref<72xf32, #tpu.memory_space<smem>>
    %86 = vector.broadcast %85 : f32 to vector<16x16xf32>
    %87 = arith.mulf %86, %76 : vector<16x16xf32>
    %88 = arith.addf %70, %87 : vector<16x16xf32>
    %c57 = arith.constant 57 : index
    %89 = memref.load %arg2[%c57] : memref<72xf32, #tpu.memory_space<smem>>
    %90 = vector.broadcast %89 : f32 to vector<16x16xf32>
    %91 = arith.mulf %90, %76 : vector<16x16xf32>
    %92 = arith.addf %74, %91 : vector<16x16xf32>
    %c0_30 = arith.constant 0 : index
    %c1_31 = arith.constant 1 : index
    %c1_32 = arith.constant 1 : index
    %93 = vector.load %arg7[%c0_30, %c1_31, %c1_32] : memref<2x18x18xf32, #tpu.memory_space<vmem>>, vector<1x16x16xf32>
    %94 = vector.shape_cast %93 : vector<1x16x16xf32> to vector<16x16xf32>
    %c4 = arith.constant 4 : index
    %95 = memref.load %arg2[%c4] : memref<72xf32, #tpu.memory_space<smem>>
    %96 = vector.broadcast %95 : f32 to vector<16x16xf32>
    %97 = arith.mulf %96, %94 : vector<16x16xf32>
    %98 = arith.addf %80, %97 : vector<16x16xf32>
    %c22 = arith.constant 22 : index
    %99 = memref.load %arg2[%c22] : memref<72xf32, #tpu.memory_space<smem>>
    %100 = vector.broadcast %99 : f32 to vector<16x16xf32>
    %101 = arith.mulf %100, %94 : vector<16x16xf32>
    %102 = arith.addf %84, %101 : vector<16x16xf32>
    %c40 = arith.constant 40 : index
    %103 = memref.load %arg2[%c40] : memref<72xf32, #tpu.memory_space<smem>>
    %104 = vector.broadcast %103 : f32 to vector<16x16xf32>
    %105 = arith.mulf %104, %94 : vector<16x16xf32>
    %106 = arith.addf %88, %105 : vector<16x16xf32>
    %c58 = arith.constant 58 : index
    %107 = memref.load %arg2[%c58] : memref<72xf32, #tpu.memory_space<smem>>
    %108 = vector.broadcast %107 : f32 to vector<16x16xf32>
    %109 = arith.mulf %108, %94 : vector<16x16xf32>
    %110 = arith.addf %92, %109 : vector<16x16xf32>
    %c0_33 = arith.constant 0 : index
    %c1_34 = arith.constant 1 : index
    %c2_35 = arith.constant 2 : index
    %111 = vector.load %arg7[%c0_33, %c1_34, %c2_35] : memref<2x18x18xf32, #tpu.memory_space<vmem>>, vector<1x16x16xf32>
    %112 = vector.shape_cast %111 : vector<1x16x16xf32> to vector<16x16xf32>
    %c5 = arith.constant 5 : index
    %113 = memref.load %arg2[%c5] : memref<72xf32, #tpu.memory_space<smem>>
    %114 = vector.broadcast %113 : f32 to vector<16x16xf32>
    %115 = arith.mulf %114, %112 : vector<16x16xf32>
    %116 = arith.addf %98, %115 : vector<16x16xf32>
    %c23 = arith.constant 23 : index
    %117 = memref.load %arg2[%c23] : memref<72xf32, #tpu.memory_space<smem>>
    %118 = vector.broadcast %117 : f32 to vector<16x16xf32>
    %119 = arith.mulf %118, %112 : vector<16x16xf32>
    %120 = arith.addf %102, %119 : vector<16x16xf32>
    %c41 = arith.constant 41 : index
    %121 = memref.load %arg2[%c41] : memref<72xf32, #tpu.memory_space<smem>>
    %122 = vector.broadcast %121 : f32 to vector<16x16xf32>
    %123 = arith.mulf %122, %112 : vector<16x16xf32>
    %124 = arith.addf %106, %123 : vector<16x16xf32>
    %c59 = arith.constant 59 : index
    %125 = memref.load %arg2[%c59] : memref<72xf32, #tpu.memory_space<smem>>
    %126 = vector.broadcast %125 : f32 to vector<16x16xf32>
    %127 = arith.mulf %126, %112 : vector<16x16xf32>
    %128 = arith.addf %110, %127 : vector<16x16xf32>
    %c0_36 = arith.constant 0 : index
    %c2_37 = arith.constant 2 : index
    %c0_38 = arith.constant 0 : index
    %129 = vector.load %arg7[%c0_36, %c2_37, %c0_38] : memref<2x18x18xf32, #tpu.memory_space<vmem>>, vector<1x16x16xf32>
    %130 = vector.shape_cast %129 : vector<1x16x16xf32> to vector<16x16xf32>
    %c6 = arith.constant 6 : index
    %131 = memref.load %arg2[%c6] : memref<72xf32, #tpu.memory_space<smem>>
    %132 = vector.broadcast %131 : f32 to vector<16x16xf32>
    %133 = arith.mulf %132, %130 : vector<16x16xf32>
    %134 = arith.addf %116, %133 : vector<16x16xf32>
    %c24 = arith.constant 24 : index
    %135 = memref.load %arg2[%c24] : memref<72xf32, #tpu.memory_space<smem>>
    %136 = vector.broadcast %135 : f32 to vector<16x16xf32>
    %137 = arith.mulf %136, %130 : vector<16x16xf32>
    %138 = arith.addf %120, %137 : vector<16x16xf32>
    %c42 = arith.constant 42 : index
    %139 = memref.load %arg2[%c42] : memref<72xf32, #tpu.memory_space<smem>>
    %140 = vector.broadcast %139 : f32 to vector<16x16xf32>
    %141 = arith.mulf %140, %130 : vector<16x16xf32>
    %142 = arith.addf %124, %141 : vector<16x16xf32>
    %c60 = arith.constant 60 : index
    %143 = memref.load %arg2[%c60] : memref<72xf32, #tpu.memory_space<smem>>
    %144 = vector.broadcast %143 : f32 to vector<16x16xf32>
    %145 = arith.mulf %144, %130 : vector<16x16xf32>
    %146 = arith.addf %128, %145 : vector<16x16xf32>
    %c0_39 = arith.constant 0 : index
    %c2_40 = arith.constant 2 : index
    %c1_41 = arith.constant 1 : index
    %147 = vector.load %arg7[%c0_39, %c2_40, %c1_41] : memref<2x18x18xf32, #tpu.memory_space<vmem>>, vector<1x16x16xf32>
    %148 = vector.shape_cast %147 : vector<1x16x16xf32> to vector<16x16xf32>
    %c7 = arith.constant 7 : index
    %149 = memref.load %arg2[%c7] : memref<72xf32, #tpu.memory_space<smem>>
    %150 = vector.broadcast %149 : f32 to vector<16x16xf32>
    %151 = arith.mulf %150, %148 : vector<16x16xf32>
    %152 = arith.addf %134, %151 : vector<16x16xf32>
    %c25 = arith.constant 25 : index
    %153 = memref.load %arg2[%c25] : memref<72xf32, #tpu.memory_space<smem>>
    %154 = vector.broadcast %153 : f32 to vector<16x16xf32>
    %155 = arith.mulf %154, %148 : vector<16x16xf32>
    %156 = arith.addf %138, %155 : vector<16x16xf32>
    %c43 = arith.constant 43 : index
    %157 = memref.load %arg2[%c43] : memref<72xf32, #tpu.memory_space<smem>>
    %158 = vector.broadcast %157 : f32 to vector<16x16xf32>
    %159 = arith.mulf %158, %148 : vector<16x16xf32>
    %160 = arith.addf %142, %159 : vector<16x16xf32>
    %c61 = arith.constant 61 : index
    %161 = memref.load %arg2[%c61] : memref<72xf32, #tpu.memory_space<smem>>
    %162 = vector.broadcast %161 : f32 to vector<16x16xf32>
    %163 = arith.mulf %162, %148 : vector<16x16xf32>
    %164 = arith.addf %146, %163 : vector<16x16xf32>
    %c0_42 = arith.constant 0 : index
    %c2_43 = arith.constant 2 : index
    %c2_44 = arith.constant 2 : index
    %165 = vector.load %arg7[%c0_42, %c2_43, %c2_44] : memref<2x18x18xf32, #tpu.memory_space<vmem>>, vector<1x16x16xf32>
    %166 = vector.shape_cast %165 : vector<1x16x16xf32> to vector<16x16xf32>
    %c8 = arith.constant 8 : index
    %167 = memref.load %arg2[%c8] : memref<72xf32, #tpu.memory_space<smem>>
    %168 = vector.broadcast %167 : f32 to vector<16x16xf32>
    %169 = arith.mulf %168, %166 : vector<16x16xf32>
    %170 = arith.addf %152, %169 : vector<16x16xf32>
    %c26 = arith.constant 26 : index
    %171 = memref.load %arg2[%c26] : memref<72xf32, #tpu.memory_space<smem>>
    %172 = vector.broadcast %171 : f32 to vector<16x16xf32>
    %173 = arith.mulf %172, %166 : vector<16x16xf32>
    %174 = arith.addf %156, %173 : vector<16x16xf32>
    %c44 = arith.constant 44 : index
    %175 = memref.load %arg2[%c44] : memref<72xf32, #tpu.memory_space<smem>>
    %176 = vector.broadcast %175 : f32 to vector<16x16xf32>
    %177 = arith.mulf %176, %166 : vector<16x16xf32>
    %178 = arith.addf %160, %177 : vector<16x16xf32>
    %c62 = arith.constant 62 : index
    %179 = memref.load %arg2[%c62] : memref<72xf32, #tpu.memory_space<smem>>
    %180 = vector.broadcast %179 : f32 to vector<16x16xf32>
    %181 = arith.mulf %180, %166 : vector<16x16xf32>
    %182 = arith.addf %164, %181 : vector<16x16xf32>
    %c1_45 = arith.constant 1 : index
    %c0_46 = arith.constant 0 : index
    %c0_47 = arith.constant 0 : index
    %183 = vector.load %arg7[%c1_45, %c0_46, %c0_47] : memref<2x18x18xf32, #tpu.memory_space<vmem>>, vector<1x16x16xf32>
    %184 = vector.shape_cast %183 : vector<1x16x16xf32> to vector<16x16xf32>
    %c9 = arith.constant 9 : index
    %185 = memref.load %arg2[%c9] : memref<72xf32, #tpu.memory_space<smem>>
    %186 = vector.broadcast %185 : f32 to vector<16x16xf32>
    %187 = arith.mulf %186, %184 : vector<16x16xf32>
    %188 = arith.addf %170, %187 : vector<16x16xf32>
    %c27 = arith.constant 27 : index
    %189 = memref.load %arg2[%c27] : memref<72xf32, #tpu.memory_space<smem>>
    %190 = vector.broadcast %189 : f32 to vector<16x16xf32>
    %191 = arith.mulf %190, %184 : vector<16x16xf32>
    %192 = arith.addf %174, %191 : vector<16x16xf32>
    %c45 = arith.constant 45 : index
    %193 = memref.load %arg2[%c45] : memref<72xf32, #tpu.memory_space<smem>>
    %194 = vector.broadcast %193 : f32 to vector<16x16xf32>
    %195 = arith.mulf %194, %184 : vector<16x16xf32>
    %196 = arith.addf %178, %195 : vector<16x16xf32>
    %c63 = arith.constant 63 : index
    %197 = memref.load %arg2[%c63] : memref<72xf32, #tpu.memory_space<smem>>
    %198 = vector.broadcast %197 : f32 to vector<16x16xf32>
    %199 = arith.mulf %198, %184 : vector<16x16xf32>
    %200 = arith.addf %182, %199 : vector<16x16xf32>
    %c1_48 = arith.constant 1 : index
    %c0_49 = arith.constant 0 : index
    %c1_50 = arith.constant 1 : index
    %201 = vector.load %arg7[%c1_48, %c0_49, %c1_50] : memref<2x18x18xf32, #tpu.memory_space<vmem>>, vector<1x16x16xf32>
    %202 = vector.shape_cast %201 : vector<1x16x16xf32> to vector<16x16xf32>
    %c10 = arith.constant 10 : index
    %203 = memref.load %arg2[%c10] : memref<72xf32, #tpu.memory_space<smem>>
    %204 = vector.broadcast %203 : f32 to vector<16x16xf32>
    %205 = arith.mulf %204, %202 : vector<16x16xf32>
    %206 = arith.addf %188, %205 : vector<16x16xf32>
    %c28 = arith.constant 28 : index
    %207 = memref.load %arg2[%c28] : memref<72xf32, #tpu.memory_space<smem>>
    %208 = vector.broadcast %207 : f32 to vector<16x16xf32>
    %209 = arith.mulf %208, %202 : vector<16x16xf32>
    %210 = arith.addf %192, %209 : vector<16x16xf32>
    %c46 = arith.constant 46 : index
    %211 = memref.load %arg2[%c46] : memref<72xf32, #tpu.memory_space<smem>>
    %212 = vector.broadcast %211 : f32 to vector<16x16xf32>
    %213 = arith.mulf %212, %202 : vector<16x16xf32>
    %214 = arith.addf %196, %213 : vector<16x16xf32>
    %c64 = arith.constant 64 : index
    %215 = memref.load %arg2[%c64] : memref<72xf32, #tpu.memory_space<smem>>
    %216 = vector.broadcast %215 : f32 to vector<16x16xf32>
    %217 = arith.mulf %216, %202 : vector<16x16xf32>
    %218 = arith.addf %200, %217 : vector<16x16xf32>
    %c1_51 = arith.constant 1 : index
    %c0_52 = arith.constant 0 : index
    %c2_53 = arith.constant 2 : index
    %219 = vector.load %arg7[%c1_51, %c0_52, %c2_53] : memref<2x18x18xf32, #tpu.memory_space<vmem>>, vector<1x16x16xf32>
    %220 = vector.shape_cast %219 : vector<1x16x16xf32> to vector<16x16xf32>
    %c11 = arith.constant 11 : index
    %221 = memref.load %arg2[%c11] : memref<72xf32, #tpu.memory_space<smem>>
    %222 = vector.broadcast %221 : f32 to vector<16x16xf32>
    %223 = arith.mulf %222, %220 : vector<16x16xf32>
    %224 = arith.addf %206, %223 : vector<16x16xf32>
    %c29 = arith.constant 29 : index
    %225 = memref.load %arg2[%c29] : memref<72xf32, #tpu.memory_space<smem>>
    %226 = vector.broadcast %225 : f32 to vector<16x16xf32>
    %227 = arith.mulf %226, %220 : vector<16x16xf32>
    %228 = arith.addf %210, %227 : vector<16x16xf32>
    %c47 = arith.constant 47 : index
    %229 = memref.load %arg2[%c47] : memref<72xf32, #tpu.memory_space<smem>>
    %230 = vector.broadcast %229 : f32 to vector<16x16xf32>
    %231 = arith.mulf %230, %220 : vector<16x16xf32>
    %232 = arith.addf %214, %231 : vector<16x16xf32>
    %c65 = arith.constant 65 : index
    %233 = memref.load %arg2[%c65] : memref<72xf32, #tpu.memory_space<smem>>
    %234 = vector.broadcast %233 : f32 to vector<16x16xf32>
    %235 = arith.mulf %234, %220 : vector<16x16xf32>
    %236 = arith.addf %218, %235 : vector<16x16xf32>
    %c1_54 = arith.constant 1 : index
    %c1_55 = arith.constant 1 : index
    %c0_56 = arith.constant 0 : index
    %237 = vector.load %arg7[%c1_54, %c1_55, %c0_56] : memref<2x18x18xf32, #tpu.memory_space<vmem>>, vector<1x16x16xf32>
    %238 = vector.shape_cast %237 : vector<1x16x16xf32> to vector<16x16xf32>
    %c12 = arith.constant 12 : index
    %239 = memref.load %arg2[%c12] : memref<72xf32, #tpu.memory_space<smem>>
    %240 = vector.broadcast %239 : f32 to vector<16x16xf32>
    %241 = arith.mulf %240, %238 : vector<16x16xf32>
    %242 = arith.addf %224, %241 : vector<16x16xf32>
    %c30 = arith.constant 30 : index
    %243 = memref.load %arg2[%c30] : memref<72xf32, #tpu.memory_space<smem>>
    %244 = vector.broadcast %243 : f32 to vector<16x16xf32>
    %245 = arith.mulf %244, %238 : vector<16x16xf32>
    %246 = arith.addf %228, %245 : vector<16x16xf32>
    %c48 = arith.constant 48 : index
    %247 = memref.load %arg2[%c48] : memref<72xf32, #tpu.memory_space<smem>>
    %248 = vector.broadcast %247 : f32 to vector<16x16xf32>
    %249 = arith.mulf %248, %238 : vector<16x16xf32>
    %250 = arith.addf %232, %249 : vector<16x16xf32>
    %c66 = arith.constant 66 : index
    %251 = memref.load %arg2[%c66] : memref<72xf32, #tpu.memory_space<smem>>
    %252 = vector.broadcast %251 : f32 to vector<16x16xf32>
    %253 = arith.mulf %252, %238 : vector<16x16xf32>
    %254 = arith.addf %236, %253 : vector<16x16xf32>
    %c1_57 = arith.constant 1 : index
    %c1_58 = arith.constant 1 : index
    %c1_59 = arith.constant 1 : index
    %255 = vector.load %arg7[%c1_57, %c1_58, %c1_59] : memref<2x18x18xf32, #tpu.memory_space<vmem>>, vector<1x16x16xf32>
    %256 = vector.shape_cast %255 : vector<1x16x16xf32> to vector<16x16xf32>
    %c13 = arith.constant 13 : index
    %257 = memref.load %arg2[%c13] : memref<72xf32, #tpu.memory_space<smem>>
    %258 = vector.broadcast %257 : f32 to vector<16x16xf32>
    %259 = arith.mulf %258, %256 : vector<16x16xf32>
    %260 = arith.addf %242, %259 : vector<16x16xf32>
    %c31 = arith.constant 31 : index
    %261 = memref.load %arg2[%c31] : memref<72xf32, #tpu.memory_space<smem>>
    %262 = vector.broadcast %261 : f32 to vector<16x16xf32>
    %263 = arith.mulf %262, %256 : vector<16x16xf32>
    %264 = arith.addf %246, %263 : vector<16x16xf32>
    %c49 = arith.constant 49 : index
    %265 = memref.load %arg2[%c49] : memref<72xf32, #tpu.memory_space<smem>>
    %266 = vector.broadcast %265 : f32 to vector<16x16xf32>
    %267 = arith.mulf %266, %256 : vector<16x16xf32>
    %268 = arith.addf %250, %267 : vector<16x16xf32>
    %c67 = arith.constant 67 : index
    %269 = memref.load %arg2[%c67] : memref<72xf32, #tpu.memory_space<smem>>
    %270 = vector.broadcast %269 : f32 to vector<16x16xf32>
    %271 = arith.mulf %270, %256 : vector<16x16xf32>
    %272 = arith.addf %254, %271 : vector<16x16xf32>
    %c1_60 = arith.constant 1 : index
    %c1_61 = arith.constant 1 : index
    %c2_62 = arith.constant 2 : index
    %273 = vector.load %arg7[%c1_60, %c1_61, %c2_62] : memref<2x18x18xf32, #tpu.memory_space<vmem>>, vector<1x16x16xf32>
    %274 = vector.shape_cast %273 : vector<1x16x16xf32> to vector<16x16xf32>
    %c14 = arith.constant 14 : index
    %275 = memref.load %arg2[%c14] : memref<72xf32, #tpu.memory_space<smem>>
    %276 = vector.broadcast %275 : f32 to vector<16x16xf32>
    %277 = arith.mulf %276, %274 : vector<16x16xf32>
    %278 = arith.addf %260, %277 : vector<16x16xf32>
    %c32 = arith.constant 32 : index
    %279 = memref.load %arg2[%c32] : memref<72xf32, #tpu.memory_space<smem>>
    %280 = vector.broadcast %279 : f32 to vector<16x16xf32>
    %281 = arith.mulf %280, %274 : vector<16x16xf32>
    %282 = arith.addf %264, %281 : vector<16x16xf32>
    %c50 = arith.constant 50 : index
    %283 = memref.load %arg2[%c50] : memref<72xf32, #tpu.memory_space<smem>>
    %284 = vector.broadcast %283 : f32 to vector<16x16xf32>
    %285 = arith.mulf %284, %274 : vector<16x16xf32>
    %286 = arith.addf %268, %285 : vector<16x16xf32>
    %c68 = arith.constant 68 : index
    %287 = memref.load %arg2[%c68] : memref<72xf32, #tpu.memory_space<smem>>
    %288 = vector.broadcast %287 : f32 to vector<16x16xf32>
    %289 = arith.mulf %288, %274 : vector<16x16xf32>
    %290 = arith.addf %272, %289 : vector<16x16xf32>
    %c1_63 = arith.constant 1 : index
    %c2_64 = arith.constant 2 : index
    %c0_65 = arith.constant 0 : index
    %291 = vector.load %arg7[%c1_63, %c2_64, %c0_65] : memref<2x18x18xf32, #tpu.memory_space<vmem>>, vector<1x16x16xf32>
    %292 = vector.shape_cast %291 : vector<1x16x16xf32> to vector<16x16xf32>
    %c15 = arith.constant 15 : index
    %293 = memref.load %arg2[%c15] : memref<72xf32, #tpu.memory_space<smem>>
    %294 = vector.broadcast %293 : f32 to vector<16x16xf32>
    %295 = arith.mulf %294, %292 : vector<16x16xf32>
    %296 = arith.addf %278, %295 : vector<16x16xf32>
    %c33 = arith.constant 33 : index
    %297 = memref.load %arg2[%c33] : memref<72xf32, #tpu.memory_space<smem>>
    %298 = vector.broadcast %297 : f32 to vector<16x16xf32>
    %299 = arith.mulf %298, %292 : vector<16x16xf32>
    %300 = arith.addf %282, %299 : vector<16x16xf32>
    %c51 = arith.constant 51 : index
    %301 = memref.load %arg2[%c51] : memref<72xf32, #tpu.memory_space<smem>>
    %302 = vector.broadcast %301 : f32 to vector<16x16xf32>
    %303 = arith.mulf %302, %292 : vector<16x16xf32>
    %304 = arith.addf %286, %303 : vector<16x16xf32>
    %c69 = arith.constant 69 : index
    %305 = memref.load %arg2[%c69] : memref<72xf32, #tpu.memory_space<smem>>
    %306 = vector.broadcast %305 : f32 to vector<16x16xf32>
    %307 = arith.mulf %306, %292 : vector<16x16xf32>
    %308 = arith.addf %290, %307 : vector<16x16xf32>
    %c1_66 = arith.constant 1 : index
    %c2_67 = arith.constant 2 : index
    %c1_68 = arith.constant 1 : index
    %309 = vector.load %arg7[%c1_66, %c2_67, %c1_68] : memref<2x18x18xf32, #tpu.memory_space<vmem>>, vector<1x16x16xf32>
    %310 = vector.shape_cast %309 : vector<1x16x16xf32> to vector<16x16xf32>
    %c16 = arith.constant 16 : index
    %311 = memref.load %arg2[%c16] : memref<72xf32, #tpu.memory_space<smem>>
    %312 = vector.broadcast %311 : f32 to vector<16x16xf32>
    %313 = arith.mulf %312, %310 : vector<16x16xf32>
    %314 = arith.addf %296, %313 : vector<16x16xf32>
    %c34 = arith.constant 34 : index
    %315 = memref.load %arg2[%c34] : memref<72xf32, #tpu.memory_space<smem>>
    %316 = vector.broadcast %315 : f32 to vector<16x16xf32>
    %317 = arith.mulf %316, %310 : vector<16x16xf32>
    %318 = arith.addf %300, %317 : vector<16x16xf32>
    %c52 = arith.constant 52 : index
    %319 = memref.load %arg2[%c52] : memref<72xf32, #tpu.memory_space<smem>>
    %320 = vector.broadcast %319 : f32 to vector<16x16xf32>
    %321 = arith.mulf %320, %310 : vector<16x16xf32>
    %322 = arith.addf %304, %321 : vector<16x16xf32>
    %c70 = arith.constant 70 : index
    %323 = memref.load %arg2[%c70] : memref<72xf32, #tpu.memory_space<smem>>
    %324 = vector.broadcast %323 : f32 to vector<16x16xf32>
    %325 = arith.mulf %324, %310 : vector<16x16xf32>
    %326 = arith.addf %308, %325 : vector<16x16xf32>
    %c1_69 = arith.constant 1 : index
    %c2_70 = arith.constant 2 : index
    %c2_71 = arith.constant 2 : index
    %327 = vector.load %arg7[%c1_69, %c2_70, %c2_71] : memref<2x18x18xf32, #tpu.memory_space<vmem>>, vector<1x16x16xf32>
    %328 = vector.shape_cast %327 : vector<1x16x16xf32> to vector<16x16xf32>
    %c17 = arith.constant 17 : index
    %329 = memref.load %arg2[%c17] : memref<72xf32, #tpu.memory_space<smem>>
    %330 = vector.broadcast %329 : f32 to vector<16x16xf32>
    %331 = arith.mulf %330, %328 : vector<16x16xf32>
    %332 = arith.addf %314, %331 : vector<16x16xf32>
    %c35 = arith.constant 35 : index
    %333 = memref.load %arg2[%c35] : memref<72xf32, #tpu.memory_space<smem>>
    %334 = vector.broadcast %333 : f32 to vector<16x16xf32>
    %335 = arith.mulf %334, %328 : vector<16x16xf32>
    %336 = arith.addf %318, %335 : vector<16x16xf32>
    %c53 = arith.constant 53 : index
    %337 = memref.load %arg2[%c53] : memref<72xf32, #tpu.memory_space<smem>>
    %338 = vector.broadcast %337 : f32 to vector<16x16xf32>
    %339 = arith.mulf %338, %328 : vector<16x16xf32>
    %340 = arith.addf %322, %339 : vector<16x16xf32>
    %c71 = arith.constant 71 : index
    %341 = memref.load %arg2[%c71] : memref<72xf32, #tpu.memory_space<smem>>
    %342 = vector.broadcast %341 : f32 to vector<16x16xf32>
    %343 = arith.mulf %342, %328 : vector<16x16xf32>
    %344 = arith.addf %326, %343 : vector<16x16xf32>
    %c0_72 = arith.constant 0 : index
    %c0_73 = arith.constant 0 : index
    %c0_74 = arith.constant 0 : index
    %c0_75 = arith.constant 0 : index
    %345 = vector.load %arg1[%c0_72, %c0_73, %c0_74, %c0_75] : memref<1x4x16x16xf32, #tpu.memory_space<vmem>>, vector<1x1x16x16xf32>
    %346 = vector.shape_cast %345 : vector<1x1x16x16xf32> to vector<16x16xf32>
    %347 = arith.addf %346, %332 : vector<16x16xf32>
    %348 = arith.subf %347, %340 : vector<16x16xf32>
    %c0_76 = arith.constant 0 : index
    %c1_77 = arith.constant 1 : index
    %c0_78 = arith.constant 0 : index
    %c0_79 = arith.constant 0 : index
    %349 = vector.load %arg1[%c0_76, %c1_77, %c0_78, %c0_79] : memref<1x4x16x16xf32, #tpu.memory_space<vmem>>, vector<1x1x16x16xf32>
    %350 = vector.shape_cast %349 : vector<1x1x16x16xf32> to vector<16x16xf32>
    %351 = arith.addf %350, %336 : vector<16x16xf32>
    %352 = arith.subf %351, %344 : vector<16x16xf32>
    %cst_80 = arith.constant 0.000000e+00 : f32
    %353 = vector.broadcast %cst_80 : f32 to vector<2x18x18xf32>
    %c0_81 = arith.constant 0 : index
    %c0_82 = arith.constant 0 : index
    %c0_83 = arith.constant 0 : index
    %354 = vector.load %arg8[%c0_81, %c0_82, %c0_83] : memref<2x18x18xf32, #tpu.memory_space<vmem>>, vector<2x18x18xf32>
    tpu.vector_store %arg8[%c0_81, %c0_82, %c0_83], %353 {strides = array<i32>} : memref<2x18x18xf32, #tpu.memory_space<vmem>>, vector<2x18x18xf32>,
    %c0_84 = arith.constant 0 : index
    %c1_85 = arith.constant 1 : index
    %c1_86 = arith.constant 1 : index
    %355 = vector.load %arg8[%c0_84, %c1_85, %c1_86] : memref<2x18x18xf32, #tpu.memory_space<vmem>>, vector<1x16x16xf32>
    %356 = vector.shape_cast %355 : vector<1x16x16xf32> to vector<16x16xf32>
    %357 = vector.shape_cast %348 : vector<16x16xf32> to vector<1x16x16xf32>
    tpu.vector_store %arg8[%c0_84, %c1_85, %c1_86], %357 {strides = array<i32>} : memref<2x18x18xf32, #tpu.memory_space<vmem>>, vector<1x16x16xf32>,
    %c0_87 = arith.constant 0 : index
    %c0_88 = arith.constant 0 : index
    %c0_89 = arith.constant 0 : index
    %c0_90 = arith.constant 0 : index
    %358 = vector.load %arg6[%c0_87, %c0_88, %c0_89, %c0_90] : memref<1x4x16x16xf32, #tpu.memory_space<vmem>>, vector<1x1x16x16xf32>
    %359 = vector.shape_cast %358 : vector<1x1x16x16xf32> to vector<16x16xf32>
    %360 = vector.shape_cast %348 : vector<16x16xf32> to vector<1x1x16x16xf32>
    tpu.vector_store %arg6[%c0_87, %c0_88, %c0_89, %c0_90], %360 {strides = array<i32>} : memref<1x4x16x16xf32, #tpu.memory_space<vmem>>, vector<1x1x16x16xf32>,
    %c1_91 = arith.constant 1 : index
    %c1_92 = arith.constant 1 : index
    %c1_93 = arith.constant 1 : index
    %361 = vector.load %arg8[%c1_91, %c1_92, %c1_93] : memref<2x18x18xf32, #tpu.memory_space<vmem>>, vector<1x16x16xf32>
    %362 = vector.shape_cast %361 : vector<1x16x16xf32> to vector<16x16xf32>
    %363 = vector.shape_cast %352 : vector<16x16xf32> to vector<1x16x16xf32>
    tpu.vector_store %arg8[%c1_91, %c1_92, %c1_93], %363 {strides = array<i32>} : memref<2x18x18xf32, #tpu.memory_space<vmem>>, vector<1x16x16xf32>,
    %c0_94 = arith.constant 0 : index
    %c1_95 = arith.constant 1 : index
    %c0_96 = arith.constant 0 : index
    %c0_97 = arith.constant 0 : index
    %364 = vector.load %arg6[%c0_94, %c1_95, %c0_96, %c0_97] : memref<1x4x16x16xf32, #tpu.memory_space<vmem>>, vector<1x1x16x16xf32>
    %365 = vector.shape_cast %364 : vector<1x1x16x16xf32> to vector<16x16xf32>
    %366 = vector.shape_cast %352 : vector<16x16xf32> to vector<1x1x16x16xf32>
    tpu.vector_store %arg6[%c0_94, %c1_95, %c0_96, %c0_97], %366 {strides = array<i32>} : memref<1x4x16x16xf32, #tpu.memory_space<vmem>>, vector<1x1x16x16xf32>,
    %cst_98 = arith.constant 0.000000e+00 : f32
    %367 = vector.broadcast %cst_98 : f32 to vector<16x16xf32>
    %c0_99 = arith.constant 0 : index
    %368 = memref.load %arg5[%c0_99] : memref<4xf32, #tpu.memory_space<smem>>
    %369 = vector.broadcast %368 : f32 to vector<16x16xf32>
    %370 = arith.addf %367, %369 : vector<16x16xf32>
    %cst_100 = arith.constant 0.000000e+00 : f32
    %371 = vector.broadcast %cst_100 : f32 to vector<16x16xf32>
    %c1_101 = arith.constant 1 : index
    %372 = memref.load %arg5[%c1_101] : memref<4xf32, #tpu.memory_space<smem>>
    %373 = vector.broadcast %372 : f32 to vector<16x16xf32>
    %374 = arith.addf %371, %373 : vector<16x16xf32>
    %cst_102 = arith.constant 0.000000e+00 : f32
    %375 = vector.broadcast %cst_102 : f32 to vector<16x16xf32>
    %c2_103 = arith.constant 2 : index
    %376 = memref.load %arg5[%c2_103] : memref<4xf32, #tpu.memory_space<smem>>
    %377 = vector.broadcast %376 : f32 to vector<16x16xf32>
    %378 = arith.addf %375, %377 : vector<16x16xf32>
    %cst_104 = arith.constant 0.000000e+00 : f32
    %379 = vector.broadcast %cst_104 : f32 to vector<16x16xf32>
    %c3_105 = arith.constant 3 : index
    %380 = memref.load %arg5[%c3_105] : memref<4xf32, #tpu.memory_space<smem>>
    %381 = vector.broadcast %380 : f32 to vector<16x16xf32>
    %382 = arith.addf %379, %381 : vector<16x16xf32>
    %c0_106 = arith.constant 0 : index
    %c0_107 = arith.constant 0 : index
    %c0_108 = arith.constant 0 : index
    %383 = vector.load %arg8[%c0_106, %c0_107, %c0_108] : memref<2x18x18xf32, #tpu.memory_space<vmem>>, vector<1x16x16xf32>
    %384 = vector.shape_cast %383 : vector<1x16x16xf32> to vector<16x16xf32>
    %c0_109 = arith.constant 0 : index
    %385 = memref.load %arg4[%c0_109] : memref<72xf32, #tpu.memory_space<smem>>
    %386 = vector.broadcast %385 : f32 to vector<16x16xf32>
    %387 = arith.mulf %386, %384 : vector<16x16xf32>
    %388 = arith.addf %370, %387 : vector<16x16xf32>
    %c18_110 = arith.constant 18 : index
    %389 = memref.load %arg4[%c18_110] : memref<72xf32, #tpu.memory_space<smem>>
    %390 = vector.broadcast %389 : f32 to vector<16x16xf32>
    %391 = arith.mulf %390, %384 : vector<16x16xf32>
    %392 = arith.addf %374, %391 : vector<16x16xf32>
    %c36_111 = arith.constant 36 : index
    %393 = memref.load %arg4[%c36_111] : memref<72xf32, #tpu.memory_space<smem>>
    %394 = vector.broadcast %393 : f32 to vector<16x16xf32>
    %395 = arith.mulf %394, %384 : vector<16x16xf32>
    %396 = arith.addf %378, %395 : vector<16x16xf32>
    %c54_112 = arith.constant 54 : index
    %397 = memref.load %arg4[%c54_112] : memref<72xf32, #tpu.memory_space<smem>>
    %398 = vector.broadcast %397 : f32 to vector<16x16xf32>
    %399 = arith.mulf %398, %384 : vector<16x16xf32>
    %400 = arith.addf %382, %399 : vector<16x16xf32>
    %c0_113 = arith.constant 0 : index
    %c0_114 = arith.constant 0 : index
    %c1_115 = arith.constant 1 : index
    %401 = vector.load %arg8[%c0_113, %c0_114, %c1_115] : memref<2x18x18xf32, #tpu.memory_space<vmem>>, vector<1x16x16xf32>
    %402 = vector.shape_cast %401 : vector<1x16x16xf32> to vector<16x16xf32>
    %c1_116 = arith.constant 1 : index
    %403 = memref.load %arg4[%c1_116] : memref<72xf32, #tpu.memory_space<smem>>
    %404 = vector.broadcast %403 : f32 to vector<16x16xf32>
    %405 = arith.mulf %404, %402 : vector<16x16xf32>
    %406 = arith.addf %388, %405 : vector<16x16xf32>
    %c19_117 = arith.constant 19 : index
    %407 = memref.load %arg4[%c19_117] : memref<72xf32, #tpu.memory_space<smem>>
    %408 = vector.broadcast %407 : f32 to vector<16x16xf32>
    %409 = arith.mulf %408, %402 : vector<16x16xf32>
    %410 = arith.addf %392, %409 : vector<16x16xf32>
    %c37_118 = arith.constant 37 : index
    %411 = memref.load %arg4[%c37_118] : memref<72xf32, #tpu.memory_space<smem>>
    %412 = vector.broadcast %411 : f32 to vector<16x16xf32>
    %413 = arith.mulf %412, %402 : vector<16x16xf32>
    %414 = arith.addf %396, %413 : vector<16x16xf32>
    %c55_119 = arith.constant 55 : index
    %415 = memref.load %arg4[%c55_119] : memref<72xf32, #tpu.memory_space<smem>>
    %416 = vector.broadcast %415 : f32 to vector<16x16xf32>
    %417 = arith.mulf %416, %402 : vector<16x16xf32>
    %418 = arith.addf %400, %417 : vector<16x16xf32>
    %c0_120 = arith.constant 0 : index
    %c0_121 = arith.constant 0 : index
    %c2_122 = arith.constant 2 : index
    %419 = vector.load %arg8[%c0_120, %c0_121, %c2_122] : memref<2x18x18xf32, #tpu.memory_space<vmem>>, vector<1x16x16xf32>
    %420 = vector.shape_cast %419 : vector<1x16x16xf32> to vector<16x16xf32>
    %c2_123 = arith.constant 2 : index
    %421 = memref.load %arg4[%c2_123] : memref<72xf32, #tpu.memory_space<smem>>
    %422 = vector.broadcast %421 : f32 to vector<16x16xf32>
    %423 = arith.mulf %422, %420 : vector<16x16xf32>
    %424 = arith.addf %406, %423 : vector<16x16xf32>
    %c20_124 = arith.constant 20 : index
    %425 = memref.load %arg4[%c20_124] : memref<72xf32, #tpu.memory_space<smem>>
    %426 = vector.broadcast %425 : f32 to vector<16x16xf32>
    %427 = arith.mulf %426, %420 : vector<16x16xf32>
    %428 = arith.addf %410, %427 : vector<16x16xf32>
    %c38_125 = arith.constant 38 : index
    %429 = memref.load %arg4[%c38_125] : memref<72xf32, #tpu.memory_space<smem>>
    %430 = vector.broadcast %429 : f32 to vector<16x16xf32>
    %431 = arith.mulf %430, %420 : vector<16x16xf32>
    %432 = arith.addf %414, %431 : vector<16x16xf32>
    %c56_126 = arith.constant 56 : index
    %433 = memref.load %arg4[%c56_126] : memref<72xf32, #tpu.memory_space<smem>>
    %434 = vector.broadcast %433 : f32 to vector<16x16xf32>
    %435 = arith.mulf %434, %420 : vector<16x16xf32>
    %436 = arith.addf %418, %435 : vector<16x16xf32>
    %c0_127 = arith.constant 0 : index
    %c1_128 = arith.constant 1 : index
    %c0_129 = arith.constant 0 : index
    %437 = vector.load %arg8[%c0_127, %c1_128, %c0_129] : memref<2x18x18xf32, #tpu.memory_space<vmem>>, vector<1x16x16xf32>
    %438 = vector.shape_cast %437 : vector<1x16x16xf32> to vector<16x16xf32>
    %c3_130 = arith.constant 3 : index
    %439 = memref.load %arg4[%c3_130] : memref<72xf32, #tpu.memory_space<smem>>
    %440 = vector.broadcast %439 : f32 to vector<16x16xf32>
    %441 = arith.mulf %440, %438 : vector<16x16xf32>
    %442 = arith.addf %424, %441 : vector<16x16xf32>
    %c21_131 = arith.constant 21 : index
    %443 = memref.load %arg4[%c21_131] : memref<72xf32, #tpu.memory_space<smem>>
    %444 = vector.broadcast %443 : f32 to vector<16x16xf32>
    %445 = arith.mulf %444, %438 : vector<16x16xf32>
    %446 = arith.addf %428, %445 : vector<16x16xf32>
    %c39_132 = arith.constant 39 : index
    %447 = memref.load %arg4[%c39_132] : memref<72xf32, #tpu.memory_space<smem>>
    %448 = vector.broadcast %447 : f32 to vector<16x16xf32>
    %449 = arith.mulf %448, %438 : vector<16x16xf32>
    %450 = arith.addf %432, %449 : vector<16x16xf32>
    %c57_133 = arith.constant 57 : index
    %451 = memref.load %arg4[%c57_133] : memref<72xf32, #tpu.memory_space<smem>>
    %452 = vector.broadcast %451 : f32 to vector<16x16xf32>
    %453 = arith.mulf %452, %438 : vector<16x16xf32>
    %454 = arith.addf %436, %453 : vector<16x16xf32>
    %c0_134 = arith.constant 0 : index
    %c1_135 = arith.constant 1 : index
    %c1_136 = arith.constant 1 : index
    %455 = vector.load %arg8[%c0_134, %c1_135, %c1_136] : memref<2x18x18xf32, #tpu.memory_space<vmem>>, vector<1x16x16xf32>
    %456 = vector.shape_cast %455 : vector<1x16x16xf32> to vector<16x16xf32>
    %c4_137 = arith.constant 4 : index
    %457 = memref.load %arg4[%c4_137] : memref<72xf32, #tpu.memory_space<smem>>
    %458 = vector.broadcast %457 : f32 to vector<16x16xf32>
    %459 = arith.mulf %458, %456 : vector<16x16xf32>
    %460 = arith.addf %442, %459 : vector<16x16xf32>
    %c22_138 = arith.constant 22 : index
    %461 = memref.load %arg4[%c22_138] : memref<72xf32, #tpu.memory_space<smem>>
    %462 = vector.broadcast %461 : f32 to vector<16x16xf32>
    %463 = arith.mulf %462, %456 : vector<16x16xf32>
    %464 = arith.addf %446, %463 : vector<16x16xf32>
    %c40_139 = arith.constant 40 : index
    %465 = memref.load %arg4[%c40_139] : memref<72xf32, #tpu.memory_space<smem>>
    %466 = vector.broadcast %465 : f32 to vector<16x16xf32>
    %467 = arith.mulf %466, %456 : vector<16x16xf32>
    %468 = arith.addf %450, %467 : vector<16x16xf32>
    %c58_140 = arith.constant 58 : index
    %469 = memref.load %arg4[%c58_140] : memref<72xf32, #tpu.memory_space<smem>>
    %470 = vector.broadcast %469 : f32 to vector<16x16xf32>
    %471 = arith.mulf %470, %456 : vector<16x16xf32>
    %472 = arith.addf %454, %471 : vector<16x16xf32>
    %c0_141 = arith.constant 0 : index
    %c1_142 = arith.constant 1 : index
    %c2_143 = arith.constant 2 : index
    %473 = vector.load %arg8[%c0_141, %c1_142, %c2_143] : memref<2x18x18xf32, #tpu.memory_space<vmem>>, vector<1x16x16xf32>
    %474 = vector.shape_cast %473 : vector<1x16x16xf32> to vector<16x16xf32>
    %c5_144 = arith.constant 5 : index
    %475 = memref.load %arg4[%c5_144] : memref<72xf32, #tpu.memory_space<smem>>
    %476 = vector.broadcast %475 : f32 to vector<16x16xf32>
    %477 = arith.mulf %476, %474 : vector<16x16xf32>
    %478 = arith.addf %460, %477 : vector<16x16xf32>
    %c23_145 = arith.constant 23 : index
    %479 = memref.load %arg4[%c23_145] : memref<72xf32, #tpu.memory_space<smem>>
    %480 = vector.broadcast %479 : f32 to vector<16x16xf32>
    %481 = arith.mulf %480, %474 : vector<16x16xf32>
    %482 = arith.addf %464, %481 : vector<16x16xf32>
    %c41_146 = arith.constant 41 : index
    %483 = memref.load %arg4[%c41_146] : memref<72xf32, #tpu.memory_space<smem>>
    %484 = vector.broadcast %483 : f32 to vector<16x16xf32>
    %485 = arith.mulf %484, %474 : vector<16x16xf32>
    %486 = arith.addf %468, %485 : vector<16x16xf32>
    %c59_147 = arith.constant 59 : index
    %487 = memref.load %arg4[%c59_147] : memref<72xf32, #tpu.memory_space<smem>>
    %488 = vector.broadcast %487 : f32 to vector<16x16xf32>
    %489 = arith.mulf %488, %474 : vector<16x16xf32>
    %490 = arith.addf %472, %489 : vector<16x16xf32>
    %c0_148 = arith.constant 0 : index
    %c2_149 = arith.constant 2 : index
    %c0_150 = arith.constant 0 : index
    %491 = vector.load %arg8[%c0_148, %c2_149, %c0_150] : memref<2x18x18xf32, #tpu.memory_space<vmem>>, vector<1x16x16xf32>
    %492 = vector.shape_cast %491 : vector<1x16x16xf32> to vector<16x16xf32>
    %c6_151 = arith.constant 6 : index
    %493 = memref.load %arg4[%c6_151] : memref<72xf32, #tpu.memory_space<smem>>
    %494 = vector.broadcast %493 : f32 to vector<16x16xf32>
    %495 = arith.mulf %494, %492 : vector<16x16xf32>
    %496 = arith.addf %478, %495 : vector<16x16xf32>
    %c24_152 = arith.constant 24 : index
    %497 = memref.load %arg4[%c24_152] : memref<72xf32, #tpu.memory_space<smem>>
    %498 = vector.broadcast %497 : f32 to vector<16x16xf32>
    %499 = arith.mulf %498, %492 : vector<16x16xf32>
    %500 = arith.addf %482, %499 : vector<16x16xf32>
    %c42_153 = arith.constant 42 : index
    %501 = memref.load %arg4[%c42_153] : memref<72xf32, #tpu.memory_space<smem>>
    %502 = vector.broadcast %501 : f32 to vector<16x16xf32>
    %503 = arith.mulf %502, %492 : vector<16x16xf32>
    %504 = arith.addf %486, %503 : vector<16x16xf32>
    %c60_154 = arith.constant 60 : index
    %505 = memref.load %arg4[%c60_154] : memref<72xf32, #tpu.memory_space<smem>>
    %506 = vector.broadcast %505 : f32 to vector<16x16xf32>
    %507 = arith.mulf %506, %492 : vector<16x16xf32>
    %508 = arith.addf %490, %507 : vector<16x16xf32>
    %c0_155 = arith.constant 0 : index
    %c2_156 = arith.constant 2 : index
    %c1_157 = arith.constant 1 : index
    %509 = vector.load %arg8[%c0_155, %c2_156, %c1_157] : memref<2x18x18xf32, #tpu.memory_space<vmem>>, vector<1x16x16xf32>
    %510 = vector.shape_cast %509 : vector<1x16x16xf32> to vector<16x16xf32>
    %c7_158 = arith.constant 7 : index
    %511 = memref.load %arg4[%c7_158] : memref<72xf32, #tpu.memory_space<smem>>
    %512 = vector.broadcast %511 : f32 to vector<16x16xf32>
    %513 = arith.mulf %512, %510 : vector<16x16xf32>
    %514 = arith.addf %496, %513 : vector<16x16xf32>
    %c25_159 = arith.constant 25 : index
    %515 = memref.load %arg4[%c25_159] : memref<72xf32, #tpu.memory_space<smem>>
    %516 = vector.broadcast %515 : f32 to vector<16x16xf32>
    %517 = arith.mulf %516, %510 : vector<16x16xf32>
    %518 = arith.addf %500, %517 : vector<16x16xf32>
    %c43_160 = arith.constant 43 : index
    %519 = memref.load %arg4[%c43_160] : memref<72xf32, #tpu.memory_space<smem>>
    %520 = vector.broadcast %519 : f32 to vector<16x16xf32>
    %521 = arith.mulf %520, %510 : vector<16x16xf32>
    %522 = arith.addf %504, %521 : vector<16x16xf32>
    %c61_161 = arith.constant 61 : index
    %523 = memref.load %arg4[%c61_161] : memref<72xf32, #tpu.memory_space<smem>>
    %524 = vector.broadcast %523 : f32 to vector<16x16xf32>
    %525 = arith.mulf %524, %510 : vector<16x16xf32>
    %526 = arith.addf %508, %525 : vector<16x16xf32>
    %c0_162 = arith.constant 0 : index
    %c2_163 = arith.constant 2 : index
    %c2_164 = arith.constant 2 : index
    %527 = vector.load %arg8[%c0_162, %c2_163, %c2_164] : memref<2x18x18xf32, #tpu.memory_space<vmem>>, vector<1x16x16xf32>
    %528 = vector.shape_cast %527 : vector<1x16x16xf32> to vector<16x16xf32>
    %c8_165 = arith.constant 8 : index
    %529 = memref.load %arg4[%c8_165] : memref<72xf32, #tpu.memory_space<smem>>
    %530 = vector.broadcast %529 : f32 to vector<16x16xf32>
    %531 = arith.mulf %530, %528 : vector<16x16xf32>
    %532 = arith.addf %514, %531 : vector<16x16xf32>
    %c26_166 = arith.constant 26 : index
    %533 = memref.load %arg4[%c26_166] : memref<72xf32, #tpu.memory_space<smem>>
    %534 = vector.broadcast %533 : f32 to vector<16x16xf32>
    %535 = arith.mulf %534, %528 : vector<16x16xf32>
    %536 = arith.addf %518, %535 : vector<16x16xf32>
    %c44_167 = arith.constant 44 : index
    %537 = memref.load %arg4[%c44_167] : memref<72xf32, #tpu.memory_space<smem>>
    %538 = vector.broadcast %537 : f32 to vector<16x16xf32>
    %539 = arith.mulf %538, %528 : vector<16x16xf32>
    %540 = arith.addf %522, %539 : vector<16x16xf32>
    %c62_168 = arith.constant 62 : index
    %541 = memref.load %arg4[%c62_168] : memref<72xf32, #tpu.memory_space<smem>>
    %542 = vector.broadcast %541 : f32 to vector<16x16xf32>
    %543 = arith.mulf %542, %528 : vector<16x16xf32>
    %544 = arith.addf %526, %543 : vector<16x16xf32>
    %c1_169 = arith.constant 1 : index
    %c0_170 = arith.constant 0 : index
    %c0_171 = arith.constant 0 : index
    %545 = vector.load %arg8[%c1_169, %c0_170, %c0_171] : memref<2x18x18xf32, #tpu.memory_space<vmem>>, vector<1x16x16xf32>
    %546 = vector.shape_cast %545 : vector<1x16x16xf32> to vector<16x16xf32>
    %c9_172 = arith.constant 9 : index
    %547 = memref.load %arg4[%c9_172] : memref<72xf32, #tpu.memory_space<smem>>
    %548 = vector.broadcast %547 : f32 to vector<16x16xf32>
    %549 = arith.mulf %548, %546 : vector<16x16xf32>
    %550 = arith.addf %532, %549 : vector<16x16xf32>
    %c27_173 = arith.constant 27 : index
    %551 = memref.load %arg4[%c27_173] : memref<72xf32, #tpu.memory_space<smem>>
    %552 = vector.broadcast %551 : f32 to vector<16x16xf32>
    %553 = arith.mulf %552, %546 : vector<16x16xf32>
    %554 = arith.addf %536, %553 : vector<16x16xf32>
    %c45_174 = arith.constant 45 : index
    %555 = memref.load %arg4[%c45_174] : memref<72xf32, #tpu.memory_space<smem>>
    %556 = vector.broadcast %555 : f32 to vector<16x16xf32>
    %557 = arith.mulf %556, %546 : vector<16x16xf32>
    %558 = arith.addf %540, %557 : vector<16x16xf32>
    %c63_175 = arith.constant 63 : index
    %559 = memref.load %arg4[%c63_175] : memref<72xf32, #tpu.memory_space<smem>>
    %560 = vector.broadcast %559 : f32 to vector<16x16xf32>
    %561 = arith.mulf %560, %546 : vector<16x16xf32>
    %562 = arith.addf %544, %561 : vector<16x16xf32>
    %c1_176 = arith.constant 1 : index
    %c0_177 = arith.constant 0 : index
    %c1_178 = arith.constant 1 : index
    %563 = vector.load %arg8[%c1_176, %c0_177, %c1_178] : memref<2x18x18xf32, #tpu.memory_space<vmem>>, vector<1x16x16xf32>
    %564 = vector.shape_cast %563 : vector<1x16x16xf32> to vector<16x16xf32>
    %c10_179 = arith.constant 10 : index
    %565 = memref.load %arg4[%c10_179] : memref<72xf32, #tpu.memory_space<smem>>
    %566 = vector.broadcast %565 : f32 to vector<16x16xf32>
    %567 = arith.mulf %566, %564 : vector<16x16xf32>
    %568 = arith.addf %550, %567 : vector<16x16xf32>
    %c28_180 = arith.constant 28 : index
    %569 = memref.load %arg4[%c28_180] : memref<72xf32, #tpu.memory_space<smem>>
    %570 = vector.broadcast %569 : f32 to vector<16x16xf32>
    %571 = arith.mulf %570, %564 : vector<16x16xf32>
    %572 = arith.addf %554, %571 : vector<16x16xf32>
    %c46_181 = arith.constant 46 : index
    %573 = memref.load %arg4[%c46_181] : memref<72xf32, #tpu.memory_space<smem>>
    %574 = vector.broadcast %573 : f32 to vector<16x16xf32>
    %575 = arith.mulf %574, %564 : vector<16x16xf32>
    %576 = arith.addf %558, %575 : vector<16x16xf32>
    %c64_182 = arith.constant 64 : index
    %577 = memref.load %arg4[%c64_182] : memref<72xf32, #tpu.memory_space<smem>>
    %578 = vector.broadcast %577 : f32 to vector<16x16xf32>
    %579 = arith.mulf %578, %564 : vector<16x16xf32>
    %580 = arith.addf %562, %579 : vector<16x16xf32>
    %c1_183 = arith.constant 1 : index
    %c0_184 = arith.constant 0 : index
    %c2_185 = arith.constant 2 : index
    %581 = vector.load %arg8[%c1_183, %c0_184, %c2_185] : memref<2x18x18xf32, #tpu.memory_space<vmem>>, vector<1x16x16xf32>
    %582 = vector.shape_cast %581 : vector<1x16x16xf32> to vector<16x16xf32>
    %c11_186 = arith.constant 11 : index
    %583 = memref.load %arg4[%c11_186] : memref<72xf32, #tpu.memory_space<smem>>
    %584 = vector.broadcast %583 : f32 to vector<16x16xf32>
    %585 = arith.mulf %584, %582 : vector<16x16xf32>
    %586 = arith.addf %568, %585 : vector<16x16xf32>
    %c29_187 = arith.constant 29 : index
    %587 = memref.load %arg4[%c29_187] : memref<72xf32, #tpu.memory_space<smem>>
    %588 = vector.broadcast %587 : f32 to vector<16x16xf32>
    %589 = arith.mulf %588, %582 : vector<16x16xf32>
    %590 = arith.addf %572, %589 : vector<16x16xf32>
    %c47_188 = arith.constant 47 : index
    %591 = memref.load %arg4[%c47_188] : memref<72xf32, #tpu.memory_space<smem>>
    %592 = vector.broadcast %591 : f32 to vector<16x16xf32>
    %593 = arith.mulf %592, %582 : vector<16x16xf32>
    %594 = arith.addf %576, %593 : vector<16x16xf32>
    %c65_189 = arith.constant 65 : index
    %595 = memref.load %arg4[%c65_189] : memref<72xf32, #tpu.memory_space<smem>>
    %596 = vector.broadcast %595 : f32 to vector<16x16xf32>
    %597 = arith.mulf %596, %582 : vector<16x16xf32>
    %598 = arith.addf %580, %597 : vector<16x16xf32>
    %c1_190 = arith.constant 1 : index
    %c1_191 = arith.constant 1 : index
    %c0_192 = arith.constant 0 : index
    %599 = vector.load %arg8[%c1_190, %c1_191, %c0_192] : memref<2x18x18xf32, #tpu.memory_space<vmem>>, vector<1x16x16xf32>
    %600 = vector.shape_cast %599 : vector<1x16x16xf32> to vector<16x16xf32>
    %c12_193 = arith.constant 12 : index
    %601 = memref.load %arg4[%c12_193] : memref<72xf32, #tpu.memory_space<smem>>
    %602 = vector.broadcast %601 : f32 to vector<16x16xf32>
    %603 = arith.mulf %602, %600 : vector<16x16xf32>
    %604 = arith.addf %586, %603 : vector<16x16xf32>
    %c30_194 = arith.constant 30 : index
    %605 = memref.load %arg4[%c30_194] : memref<72xf32, #tpu.memory_space<smem>>
    %606 = vector.broadcast %605 : f32 to vector<16x16xf32>
    %607 = arith.mulf %606, %600 : vector<16x16xf32>
    %608 = arith.addf %590, %607 : vector<16x16xf32>
    %c48_195 = arith.constant 48 : index
    %609 = memref.load %arg4[%c48_195] : memref<72xf32, #tpu.memory_space<smem>>
    %610 = vector.broadcast %609 : f32 to vector<16x16xf32>
    %611 = arith.mulf %610, %600 : vector<16x16xf32>
    %612 = arith.addf %594, %611 : vector<16x16xf32>
    %c66_196 = arith.constant 66 : index
    %613 = memref.load %arg4[%c66_196] : memref<72xf32, #tpu.memory_space<smem>>
    %614 = vector.broadcast %613 : f32 to vector<16x16xf32>
    %615 = arith.mulf %614, %600 : vector<16x16xf32>
    %616 = arith.addf %598, %615 : vector<16x16xf32>
    %c1_197 = arith.constant 1 : index
    %c1_198 = arith.constant 1 : index
    %c1_199 = arith.constant 1 : index
    %617 = vector.load %arg8[%c1_197, %c1_198, %c1_199] : memref<2x18x18xf32, #tpu.memory_space<vmem>>, vector<1x16x16xf32>
    %618 = vector.shape_cast %617 : vector<1x16x16xf32> to vector<16x16xf32>
    %c13_200 = arith.constant 13 : index
    %619 = memref.load %arg4[%c13_200] : memref<72xf32, #tpu.memory_space<smem>>
    %620 = vector.broadcast %619 : f32 to vector<16x16xf32>
    %621 = arith.mulf %620, %618 : vector<16x16xf32>
    %622 = arith.addf %604, %621 : vector<16x16xf32>
    %c31_201 = arith.constant 31 : index
    %623 = memref.load %arg4[%c31_201] : memref<72xf32, #tpu.memory_space<smem>>
    %624 = vector.broadcast %623 : f32 to vector<16x16xf32>
    %625 = arith.mulf %624, %618 : vector<16x16xf32>
    %626 = arith.addf %608, %625 : vector<16x16xf32>
    %c49_202 = arith.constant 49 : index
    %627 = memref.load %arg4[%c49_202] : memref<72xf32, #tpu.memory_space<smem>>
    %628 = vector.broadcast %627 : f32 to vector<16x16xf32>
    %629 = arith.mulf %628, %618 : vector<16x16xf32>
    %630 = arith.addf %612, %629 : vector<16x16xf32>
    %c67_203 = arith.constant 67 : index
    %631 = memref.load %arg4[%c67_203] : memref<72xf32, #tpu.memory_space<smem>>
    %632 = vector.broadcast %631 : f32 to vector<16x16xf32>
    %633 = arith.mulf %632, %618 : vector<16x16xf32>
    %634 = arith.addf %616, %633 : vector<16x16xf32>
    %c1_204 = arith.constant 1 : index
    %c1_205 = arith.constant 1 : index
    %c2_206 = arith.constant 2 : index
    %635 = vector.load %arg8[%c1_204, %c1_205, %c2_206] : memref<2x18x18xf32, #tpu.memory_space<vmem>>, vector<1x16x16xf32>
    %636 = vector.shape_cast %635 : vector<1x16x16xf32> to vector<16x16xf32>
    %c14_207 = arith.constant 14 : index
    %637 = memref.load %arg4[%c14_207] : memref<72xf32, #tpu.memory_space<smem>>
    %638 = vector.broadcast %637 : f32 to vector<16x16xf32>
    %639 = arith.mulf %638, %636 : vector<16x16xf32>
    %640 = arith.addf %622, %639 : vector<16x16xf32>
    %c32_208 = arith.constant 32 : index
    %641 = memref.load %arg4[%c32_208] : memref<72xf32, #tpu.memory_space<smem>>
    %642 = vector.broadcast %641 : f32 to vector<16x16xf32>
    %643 = arith.mulf %642, %636 : vector<16x16xf32>
    %644 = arith.addf %626, %643 : vector<16x16xf32>
    %c50_209 = arith.constant 50 : index
    %645 = memref.load %arg4[%c50_209] : memref<72xf32, #tpu.memory_space<smem>>
    %646 = vector.broadcast %645 : f32 to vector<16x16xf32>
    %647 = arith.mulf %646, %636 : vector<16x16xf32>
    %648 = arith.addf %630, %647 : vector<16x16xf32>
    %c68_210 = arith.constant 68 : index
    %649 = memref.load %arg4[%c68_210] : memref<72xf32, #tpu.memory_space<smem>>
    %650 = vector.broadcast %649 : f32 to vector<16x16xf32>
    %651 = arith.mulf %650, %636 : vector<16x16xf32>
    %652 = arith.addf %634, %651 : vector<16x16xf32>
    %c1_211 = arith.constant 1 : index
    %c2_212 = arith.constant 2 : index
    %c0_213 = arith.constant 0 : index
    %653 = vector.load %arg8[%c1_211, %c2_212, %c0_213] : memref<2x18x18xf32, #tpu.memory_space<vmem>>, vector<1x16x16xf32>
    %654 = vector.shape_cast %653 : vector<1x16x16xf32> to vector<16x16xf32>
    %c15_214 = arith.constant 15 : index
    %655 = memref.load %arg4[%c15_214] : memref<72xf32, #tpu.memory_space<smem>>
    %656 = vector.broadcast %655 : f32 to vector<16x16xf32>
    %657 = arith.mulf %656, %654 : vector<16x16xf32>
    %658 = arith.addf %640, %657 : vector<16x16xf32>
    %c33_215 = arith.constant 33 : index
    %659 = memref.load %arg4[%c33_215] : memref<72xf32, #tpu.memory_space<smem>>
    %660 = vector.broadcast %659 : f32 to vector<16x16xf32>
    %661 = arith.mulf %660, %654 : vector<16x16xf32>
    %662 = arith.addf %644, %661 : vector<16x16xf32>
    %c51_216 = arith.constant 51 : index
    %663 = memref.load %arg4[%c51_216] : memref<72xf32, #tpu.memory_space<smem>>
    %664 = vector.broadcast %663 : f32 to vector<16x16xf32>
    %665 = arith.mulf %664, %654 : vector<16x16xf32>
    %666 = arith.addf %648, %665 : vector<16x16xf32>
    %c69_217 = arith.constant 69 : index
    %667 = memref.load %arg4[%c69_217] : memref<72xf32, #tpu.memory_space<smem>>
    %668 = vector.broadcast %667 : f32 to vector<16x16xf32>
    %669 = arith.mulf %668, %654 : vector<16x16xf32>
    %670 = arith.addf %652, %669 : vector<16x16xf32>
    %c1_218 = arith.constant 1 : index
    %c2_219 = arith.constant 2 : index
    %c1_220 = arith.constant 1 : index
    %671 = vector.load %arg8[%c1_218, %c2_219, %c1_220] : memref<2x18x18xf32, #tpu.memory_space<vmem>>, vector<1x16x16xf32>
    %672 = vector.shape_cast %671 : vector<1x16x16xf32> to vector<16x16xf32>
    %c16_221 = arith.constant 16 : index
    %673 = memref.load %arg4[%c16_221] : memref<72xf32, #tpu.memory_space<smem>>
    %674 = vector.broadcast %673 : f32 to vector<16x16xf32>
    %675 = arith.mulf %674, %672 : vector<16x16xf32>
    %676 = arith.addf %658, %675 : vector<16x16xf32>
    %c34_222 = arith.constant 34 : index
    %677 = memref.load %arg4[%c34_222] : memref<72xf32, #tpu.memory_space<smem>>
    %678 = vector.broadcast %677 : f32 to vector<16x16xf32>
    %679 = arith.mulf %678, %672 : vector<16x16xf32>
    %680 = arith.addf %662, %679 : vector<16x16xf32>
    %c52_223 = arith.constant 52 : index
    %681 = memref.load %arg4[%c52_223] : memref<72xf32, #tpu.memory_space<smem>>
    %682 = vector.broadcast %681 : f32 to vector<16x16xf32>
    %683 = arith.mulf %682, %672 : vector<16x16xf32>
    %684 = arith.addf %666, %683 : vector<16x16xf32>
    %c70_224 = arith.constant 70 : index
    %685 = memref.load %arg4[%c70_224] : memref<72xf32, #tpu.memory_space<smem>>
    %686 = vector.broadcast %685 : f32 to vector<16x16xf32>
    %687 = arith.mulf %686, %672 : vector<16x16xf32>
    %688 = arith.addf %670, %687 : vector<16x16xf32>
    %c1_225 = arith.constant 1 : index
    %c2_226 = arith.constant 2 : index
    %c2_227 = arith.constant 2 : index
    %689 = vector.load %arg8[%c1_225, %c2_226, %c2_227] : memref<2x18x18xf32, #tpu.memory_space<vmem>>, vector<1x16x16xf32>
    %690 = vector.shape_cast %689 : vector<1x16x16xf32> to vector<16x16xf32>
    %c17_228 = arith.constant 17 : index
    %691 = memref.load %arg4[%c17_228] : memref<72xf32, #tpu.memory_space<smem>>
    %692 = vector.broadcast %691 : f32 to vector<16x16xf32>
    %693 = arith.mulf %692, %690 : vector<16x16xf32>
    %694 = arith.addf %676, %693 : vector<16x16xf32>
    %c35_229 = arith.constant 35 : index
    %695 = memref.load %arg4[%c35_229] : memref<72xf32, #tpu.memory_space<smem>>
    %696 = vector.broadcast %695 : f32 to vector<16x16xf32>
    %697 = arith.mulf %696, %690 : vector<16x16xf32>
    %698 = arith.addf %680, %697 : vector<16x16xf32>
    %c53_230 = arith.constant 53 : index
    %699 = memref.load %arg4[%c53_230] : memref<72xf32, #tpu.memory_space<smem>>
    %700 = vector.broadcast %699 : f32 to vector<16x16xf32>
    %701 = arith.mulf %700, %690 : vector<16x16xf32>
    %702 = arith.addf %684, %701 : vector<16x16xf32>
    %c71_231 = arith.constant 71 : index
    %703 = memref.load %arg4[%c71_231] : memref<72xf32, #tpu.memory_space<smem>>
    %704 = vector.broadcast %703 : f32 to vector<16x16xf32>
    %705 = arith.mulf %704, %690 : vector<16x16xf32>
    %706 = arith.addf %688, %705 : vector<16x16xf32>
    %cst_232 = arith.constant 0.000000e+00 : f32
    %707 = vector.broadcast %cst_232 : f32 to vector<16x16xf32>
    %708 = arith.subf %707, %694 : vector<16x16xf32>
    %709 = math.exp %708 : vector<16x16xf32>
    %cst_233 = arith.constant 1.000000e+00 : f32
    %710 = vector.broadcast %cst_233 : f32 to vector<16x16xf32>
    %711 = arith.addf %710, %709 : vector<16x16xf32>
    %712 = tpu.reciprocal %711 {approx = true} : vector<16x16xf32> -> vector<16x16xf32>
    %cst_234 = arith.constant 2.000000e+00 : f32
    %713 = vector.broadcast %cst_234 : f32 to vector<16x16xf32>
    %714 = arith.mulf %713, %712 : vector<16x16xf32>
    %cst_235 = arith.constant 1.000000e+00 : f32
    %715 = vector.broadcast %cst_235 : f32 to vector<16x16xf32>
    %716 = arith.subf %714, %715 : vector<16x16xf32>
    %cst_236 = arith.constant 1.000000e+00 : f32
    %717 = vector.broadcast %cst_236 : f32 to vector<16x16xf32>
    %718 = arith.mulf %717, %716 : vector<16x16xf32>
    %c0_237 = arith.constant 0 : index
    %c2_238 = arith.constant 2 : index
    %c0_239 = arith.constant 0 : index
    %c0_240 = arith.constant 0 : index
    %719 = vector.load %arg1[%c0_237, %c2_238, %c0_239, %c0_240] : memref<1x4x16x16xf32, #tpu.memory_space<vmem>>, vector<1x1x16x16xf32>
    %720 = vector.shape_cast %719 : vector<1x1x16x16xf32> to vector<16x16xf32>
    %721 = math.exp %718 : vector<16x16xf32>
    %722 = arith.mulf %720, %721 : vector<16x16xf32>
    %723 = arith.addf %722, %702 : vector<16x16xf32>
    %c0_241 = arith.constant 0 : index
    %c2_242 = arith.constant 2 : index
    %c0_243 = arith.constant 0 : index
    %c0_244 = arith.constant 0 : index
    %724 = vector.load %arg6[%c0_241, %c2_242, %c0_243, %c0_244] : memref<1x4x16x16xf32, #tpu.memory_space<vmem>>, vector<1x1x16x16xf32>
    %725 = vector.shape_cast %724 : vector<1x1x16x16xf32> to vector<16x16xf32>
    %726 = vector.shape_cast %723 : vector<16x16xf32> to vector<1x1x16x16xf32>
    tpu.vector_store %arg6[%c0_241, %c2_242, %c0_243, %c0_244], %726 {strides = array<i32>} : memref<1x4x16x16xf32, #tpu.memory_space<vmem>>, vector<1x1x16x16xf32>,
    %cst_245 = arith.constant 0.000000e+00 : f32
    %727 = vector.broadcast %cst_245 : f32 to vector<16x16xf32>
    %728 = arith.subf %727, %698 : vector<16x16xf32>
    %729 = math.exp %728 : vector<16x16xf32>
    %cst_246 = arith.constant 1.000000e+00 : f32
    %730 = vector.broadcast %cst_246 : f32 to vector<16x16xf32>
    %731 = arith.addf %730, %729 : vector<16x16xf32>
    %732 = tpu.reciprocal %731 {approx = true} : vector<16x16xf32> -> vector<16x16xf32>
    %cst_247 = arith.constant 2.000000e+00 : f32
    %733 = vector.broadcast %cst_247 : f32 to vector<16x16xf32>
    %734 = arith.mulf %733, %732 : vector<16x16xf32>
    %cst_248 = arith.constant 1.000000e+00 : f32
    %735 = vector.broadcast %cst_248 : f32 to vector<16x16xf32>
    %736 = arith.subf %734, %735 : vector<16x16xf32>
    %cst_249 = arith.constant 1.000000e+00 : f32
    %737 = vector.broadcast %cst_249 : f32 to vector<16x16xf32>
    %738 = arith.mulf %737, %736 : vector<16x16xf32>
    %c0_250 = arith.constant 0 : index
    %c3_251 = arith.constant 3 : index
    %c0_252 = arith.constant 0 : index
    %c0_253 = arith.constant 0 : index
    %739 = vector.load %arg1[%c0_250, %c3_251, %c0_252, %c0_253] : memref<1x4x16x16xf32, #tpu.memory_space<vmem>>, vector<1x1x16x16xf32>
    %740 = vector.shape_cast %739 : vector<1x1x16x16xf32> to vector<16x16xf32>
    %741 = math.exp %738 : vector<16x16xf32>
    %742 = arith.mulf %740, %741 : vector<16x16xf32>
    %743 = arith.addf %742, %706 : vector<16x16xf32>
    %c0_254 = arith.constant 0 : index
    %c3_255 = arith.constant 3 : index
    %c0_256 = arith.constant 0 : index
    %c0_257 = arith.constant 0 : index
    %744 = vector.load %arg6[%c0_254, %c3_255, %c0_256, %c0_257] : memref<1x4x16x16xf32, #tpu.memory_space<vmem>>, vector<1x1x16x16xf32>
    %745 = vector.shape_cast %744 : vector<1x1x16x16xf32> to vector<16x16xf32>
    %746 = vector.shape_cast %743 : vector<16x16xf32> to vector<1x1x16x16xf32>
    tpu.vector_store %arg6[%c0_254, %c3_255, %c0_256, %c0_257], %746 {strides = array<i32>} : memref<1x4x16x16xf32, #tpu.memory_space<vmem>>, vector<1x1x16x16xf32>,
    return
  }
  func.func @transform_0(%arg0: i32) -> (i32, i32, i32, i32) {
    %c0_i32 = arith.constant 0 : i32
    %c0_i32_0 = arith.constant 0 : i32
    %c0_i32_1 = arith.constant 0 : i32
    %c0_i32_2 = arith.constant 0 : i32
    return %arg0, %c0_i32, %c0_i32_0, %c0_i32_1 : i32, i32, i32, i32
  }
  func.func @transform_1(%arg0: i32) -> i32 {
    %c0_i32 = arith.constant 0 : i32
    %c0_i32_0 = arith.constant 0 : i32
    return %c0_i32 : i32
  }
  func.func @transform_2(%arg0: i32) -> i32 {
    %c0_i32 = arith.constant 0 : i32
    %c0_i32_0 = arith.constant 0 : i32
    return %c0_i32 : i32
  }
  func.func @transform_3(%arg0: i32) -> i32 {
    %c0_i32 = arith.constant 0 : i32
    %c0_i32_0 = arith.constant 0 : i32
    return %c0_i32 : i32
  }
  func.func @transform_4(%arg0: i32) -> i32 {
    %c0_i32 = arith.constant 0 : i32
    %c0_i32_0 = arith.constant 0 : i32
    return %c0_i32 : i32
  }
  func.func @transform_5(%arg0: i32) -> (i32, i32, i32, i32) {
    %c0_i32 = arith.constant 0 : i32
    %c0_i32_0 = arith.constant 0 : i32
    %c0_i32_1 = arith.constant 0 : i32
    %c0_i32_2 = arith.constant 0 : i32
    return %arg0, %c0_i32, %c0_i32_0, %c0_i32_1 : i32, i32, i32, i32
  }
}

</mosaic_0001>

<llo_original>
// kernel: tpu_custom_call.1
$region0: #{tpu_custom_call.1}
  #allocation0 [shape = 'u32[]', space=smem, size = 0x4, offset = 0x4, fixed_abs, tag = 'smem constant byte address 0x4 - core index']
  #allocation1 [shape = 'u32[144,128]{1,0:T(1,128)}', space=vmem, size = 0x12000, scoped, tag = 'internal scratch']
  #allocation2 [shape = 'f32[2,18,18]{2,1,0:T(8,128)}', space=vmem, size = 0x6000, scoped, tag = 'scratch operand']
  #allocation3 [shape = 'f32[2,18,18]{2,1,0:T(8,128)}', space=vmem, size = 0x6000, scoped, tag = 'scratch operand']
  %s0 = inlined_call_operand.hbm [shape: f32[2,4,16,16], index: 0, kind: input, shape index: {}]
  %s1 = inlined_call_operand.vmem [shape: f32[72], index: 1, kind: input, shape index: {}]
  %s2 = inlined_call_operand.vmem [shape: f32[4], index: 2, kind: input, shape index: {}]
  %s3 = inlined_call_operand.vmem [shape: f32[72], index: 3, kind: input, shape index: {}]
  %s4 = inlined_call_operand.vmem [shape: f32[4], index: 4, kind: input, shape index: {}]
  %s5 = inlined_call_operand.hbm [shape: f32[2,4,16,16], index: 5, kind: output, shape index: {}]
  %s6 = sld [smem:[#allocation0]]
  $region73: #{tpu_custom_call.1} parent=0
    _
  %s8 = ssub.s32 1, %s6
  %s9 = scalar_select 0, %s8, %s6
  $region1: #{tpu_custom_call.1} parent=0
    #allocation4 [shape = 'u8[65536]{0}', space=vmem, size = 0x10000, scoped, tag = 'input window, operand 0']
    #allocation5 [shape = 's32[2]{0}', space=sflag, size = 0x8, scoped, tag = 'scoped memory for tpu_custom_call.1']
    #allocation6 [shape = 's32[2]{0}', space=sflag, size = 0x8, scoped, tag = 'scoped memory for tpu_custom_call.1']
    #allocation7 [shape = 's32[2]{0}', space=sflag, size = 0x8, scoped, tag = 'scoped memory for tpu_custom_call.1']
    #allocation8 [shape = 'u8[512]{0}', space=smem, size = 0x200, scoped, tag = 'input window, operand 1, single buffered']
    #allocation9 [shape = 'u8[512]{0}', space=smem, size = 0x200, scoped, tag = 'input window, operand 2, single buffered']
    #allocation10 [shape = 's32[1]{0}', space=sflag, size = 0x4, scoped, tag = 'scoped memory for tpu_custom_call.1']
    #allocation11 [shape = 'u8[512]{0}', space=smem, size = 0x200, scoped, tag = 'input window, operand 3, single buffered']
    #allocation12 [shape = 'u8[512]{0}', space=smem, size = 0x200, scoped, tag = 'input window, operand 4, single buffered']
    #allocation13 [shape = 's32[1]{0}', space=sflag, size = 0x4, scoped, tag = 'scoped memory for tpu_custom_call.1']
    #allocation14 [shape = 'u8[65536]{0}', space=vmem, size = 0x10000, scoped, tag = 'output window, operand 0']
    %10 = vsyncpa [#allocation5], 0
    %s11 = scalar_lea.sflag [#allocation5], 1
    %12 = vsyncpa %s11, 0
    %13 = vsyncpa [#allocation7], 0
    %14 = vsyncpa [#allocation10], 0
    %15 = vsyncpa [#allocation13], 0
    %16 = vsyncpa [#allocation6], 0
    %s17 = scalar_lea.sflag [#allocation6], 1
    %18 = vsyncpa %s17, 0
    loop: start=0, step=1, limit=4
    $region2: #{tpu_custom_call.1} parent=1 // loop_pre_header
      _
    $region3: #{tpu_custom_call.1} parent=1 // loop_header
      %s20 = sphi 0, %s24
      %p21 = scmp.ge.s32.totalorder %s20, 4
      %s30 = sphi 0, %s32
      %s33 = sphi 0, %s30
      %s34 = sphi 0, %s33
      %s50 = sphi 0, %s34
      %s54 = sphi 0, %s54
      %s56 = sphi 0, %s54
      %s57 = sphi 0, %s56
      %s71 = sphi 0, %s57
      %s75 = sphi 0, %s75
      %s77 = sphi 0, %s75
      %s78 = sphi 0, %s77
      %s92 = sphi 0, %s78
      %s96 = sphi 0, %s96
      %s98 = sphi 0, %s96
      %s99 = sphi 0, %s98
      %s113 = sphi 0, %s99
      %s117 = sphi 0, %s117
      %s119 = sphi 0, %s117
      %s120 = sphi 0, %s119
      %s134 = sphi 0, %s120
      %s140 = sphi 0, %s142
      %s143 = sphi 0, %s140
      %s144 = sphi 0, %s143
      %s160 = sphi 0, %s144
    $region4: #{tpu_custom_call.1} parent=1 // loop_header_branch
      %23 = sbr.rel (%p21) target = $region8
    $region5: #{tpu_custom_call.1} parent=1 // loop_body
      %s25 = ssub.s32 %s20, 1
      %s26 = ssub.s32 %s20, 2
      %s27 = sadd.s32 %s20, 1
      %s28 = ssub.s32 %s20, %s27
      %p29 = scmp.eq.s32.totalorder %s28, 0
      %s31 = sadd.s32 %s30, 1
      %s32 = scalar_select %p29, %s30, %s31
      %p35 = pneg %p29
      %p36 = scmp.eq.s32.totalorder %s20, 1
      %p37 = por %p35, %p36
      %p38 = scmp.ne.s32.totalorder %s30, %s33
      %p39 = scmp.eq.s32.totalorder %s20, 0
      %p40 = por %p38, %p39
      %p41 = scmp.ne.s32.totalorder %s30, %s33
      %p42 = scmp.eq.s32.totalorder %s25, 1
      %p43 = por %p41, %p42
      %p44 = scmp.ne.s32.totalorder %s33, %s34
      %p45 = scmp.eq.s32.totalorder %s25, 0
      %p46 = por %p44, %p45
      %p47 = scmp.ne.s32.totalorder %s33, %s34
      %p48 = scmp.eq.s32.totalorder %s26, 1
      %p49 = por %p47, %p48
      %p51 = scmp.ne.s32.totalorder %s34, %s50
      %p52 = scmp.eq.s32.totalorder %s26, 0
      %p53 = por %p51, %p52
      %s55 = sadd.s32 %s54, 1
      %p58 = scmp.eq.s32.totalorder %s20, 1
      %p59 = scmp.ne.s32.totalorder %s54, %s56
      %p60 = scmp.eq.s32.totalorder %s20, 0
      %p61 = por %p59, %p60
      %p62 = scmp.ne.s32.totalorder %s54, %s56
      %p63 = scmp.eq.s32.totalorder %s25, 1
      %p64 = por %p62, %p63
      %p65 = scmp.ne.s32.totalorder %s56, %s57
      %p66 = scmp.eq.s32.totalorder %s25, 0
      %p67 = por %p65, %p66
      %p68 = scmp.ne.s32.totalorder %s56, %s57
      %p69 = scmp.eq.s32.totalorder %s26, 1
      %p70 = por %p68, %p69
      %p72 = scmp.ne.s32.totalorder %s57, %s71
      %p73 = scmp.eq.s32.totalorder %s26, 0
      %p74 = por %p72, %p73
      %s76 = sadd.s32 %s75, 1
      %p79 = scmp.eq.s32.totalorder %s20, 1
      %p80 = scmp.ne.s32.totalorder %s75, %s77
      %p81 = scmp.eq.s32.totalorder %s20, 0
      %p82 = por %p80, %p81
      %p83 = scmp.ne.s32.totalorder %s75, %s77
      %p84 = scmp.eq.s32.totalorder %s25, 1
      %p85 = por %p83, %p84
      %p86 = scmp.ne.s32.totalorder %s77, %s78
      %p87 = scmp.eq.s32.totalorder %s25, 0
      %p88 = por %p86, %p87
      %p89 = scmp.ne.s32.totalorder %s77, %s78
      %p90 = scmp.eq.s32.totalorder %s26, 1
      %p91 = por %p89, %p90
      %p93 = scmp.ne.s32.totalorder %s78, %s92
      %p94 = scmp.eq.s32.totalorder %s26, 0
      %p95 = por %p93, %p94
      %s97 = sadd.s32 %s96, 1
      %p100 = scmp.eq.s32.totalorder %s20, 1
      %p101 = scmp.ne.s32.totalorder %s96, %s98
      %p102 = scmp.eq.s32.totalorder %s20, 0
      %p103 = por %p101, %p102
      %p104 = scmp.ne.s32.totalorder %s96, %s98
      %p105 = scmp.eq.s32.totalorder %s25, 1
      %p106 = por %p104, %p105
      %p107 = scmp.ne.s32.totalorder %s98, %s99
      %p108 = scmp.eq.s32.totalorder %s25, 0
      %p109 = por %p107, %p108
      %p110 = scmp.ne.s32.totalorder %s98, %s99
      %p111 = scmp.eq.s32.totalorder %s26, 1
      %p112 = por %p110, %p111
      %p114 = scmp.ne.s32.totalorder %s99, %s113
      %p115 = scmp.eq.s32.totalorder %s26, 0
      %p116 = por %p114, %p115
      %s118 = sadd.s32 %s117, 1
      %p121 = scmp.eq.s32.totalorder %s20, 1
      %p122 = scmp.ne.s32.totalorder %s117, %s119
      %p123 = scmp.eq.s32.totalorder %s20, 0
      %p124 = por %p122, %p123
      %p125 = scmp.ne.s32.totalorder %s117, %s119
      %p126 = scmp.eq.s32.totalorder %s25, 1
      %p127 = por %p125, %p126
      %p128 = scmp.ne.s32.totalorder %s119, %s120
      %p129 = scmp.eq.s32.totalorder %s25, 0
      %p130 = por %p128, %p129
      %p131 = scmp.ne.s32.totalorder %s119, %s120
      %p132 = scmp.eq.s32.totalorder %s26, 1
      %p133 = por %p131, %p132
      %p135 = scmp.ne.s32.totalorder %s120, %s134
      %p136 = scmp.eq.s32.totalorder %s26, 0
      %p137 = por %p135, %p136
      %s138 = ssub.s32 %s20, %s27
      %p139 = scmp.eq.s32.totalorder %s138, 0
      %s141 = sadd.s32 %s140, 1
      %s142 = scalar_select %p139, %s140, %s141
      %p145 = pneg %p139
      %p146 = scmp.eq.s32.totalorder %s20, 1
      %p147 = por %p145, %p146
      %p148 = scmp.ne.s32.totalorder %s140, %s143
      %p149 = scmp.eq.s32.totalorder %s20, 0
      %p150 = por %p148, %p149
      %p151 = scmp.ne.s32.totalorder %s140, %s143
      %p152 = scmp.eq.s32.totalorder %s25, 1
      %p153 = por %p151, %p152
      %p154 = scmp.ne.s32.totalorder %s143, %s144
      %p155 = scmp.eq.s32.totalorder %s25, 0
      %p156 = por %p154, %p155
      %p157 = scmp.ne.s32.totalorder %s143, %s144
      %p158 = scmp.eq.s32.totalorder %s26, 1
      %p159 = por %p157, %p158
      %p161 = scmp.ne.s32.totalorder %s144, %s160
      %p162 = scmp.eq.s32.totalorder %s26, 0
      %p163 = por %p161, %p162
      %p164 = scmp.le.s32.totalorder 1, %s20
      %p165 = scmp.lt.s32.totalorder %s20, 3
      %p166 = pnand %p164, %p165
      %p167 = pneg %p166
      // Predicated region
      $region9: #{tpu_custom_call.1} parent=5 // pred_check
        _
      $region10: #{tpu_custom_call.1} parent=5 // pred_check_branch
        %169 = sbr.rel (%p166) target = $region12
      $region11: #{tpu_custom_call.1} parent=5 // pred_region
        %s170 = ssub.s32 %s20, 1
        // Predicated region
        $region13: #{tpu_custom_call.1} parent=11 // pred_check
          %p171 = pneg %p67
        $region14: #{tpu_custom_call.1} parent=11 // pred_check_branch
          %173 = sbr.rel (%p171) target = $region16
        $region15: #{tpu_custom_call.1} parent=11 // pred_region
          %s175 = ssub.s32 16, 16
          %176 = vsyncadd [#allocation7], %s175
          %s178 = sshll.u32 %s1, 4
          %s179 = int_to_ptr.vmem [resolvable:$true] %s178
          %181 = dma.vmem_to_smem %s179, 16, [#allocation8], [#allocation7]
        $region16: #{tpu_custom_call.1} parent=11 // pred_fallthru
          _
        // Predicated region
        $region17: #{tpu_custom_call.1} parent=11 // pred_check
          %p182 = pneg %p88
        $region18: #{tpu_custom_call.1} parent=11 // pred_check_branch
          %184 = sbr.rel (%p182) target = $region20
        $region19: #{tpu_custom_call.1} parent=11 // pred_region
          %s186 = ssub.s32 16, 16
          %187 = vsyncadd [#allocation10], %s186
          %s189 = sshll.u32 %s2, 4
          %s190 = int_to_ptr.vmem [resolvable:$true] %s189
          %192 = dma.vmem_to_smem %s190, 16, [#allocation9], [#allocation10]
        $region20: #{tpu_custom_call.1} parent=11 // pred_fallthru
          _
        // Predicated region
        $region21: #{tpu_custom_call.1} parent=11 // pred_check
          %p193 = pneg %p109
        $region22: #{tpu_custom_call.1} parent=11 // pred_check_branch
          %195 = sbr.rel (%p193) target = $region24
        $region23: #{tpu_custom_call.1} parent=11 // pred_region
          %s197 = ssub.s32 16, 16
          %198 = vsyncadd [#allocation10], %s197
          %s200 = sshll.u32 %s3, 4
          %s201 = int_to_ptr.vmem [resolvable:$true] %s200
          %203 = dma.vmem_to_smem %s201, 16, [#allocation11], [#allocation10]
        $region24: #{tpu_custom_call.1} parent=11 // pred_fallthru
          _
        // Predicated region
        $region25: #{tpu_custom_call.1} parent=11 // pred_check
          %p204 = pneg %p130
        $region26: #{tpu_custom_call.1} parent=11 // pred_check_branch
          %206 = sbr.rel (%p204) target = $region28
        $region27: #{tpu_custom_call.1} parent=11 // pred_region
          %s208 = ssub.s32 16, 16
          %209 = vsyncadd [#allocation13], %s208
          %s211 = sshll.u32 %s4, 4
          %s212 = int_to_ptr.vmem [resolvable:$true] %s211
          %214 = dma.vmem_to_smem %s212, 16, [#allocation12], [#allocation13]
        $region28: #{tpu_custom_call.1} parent=11 // pred_fallthru
          _
      $region12: #{tpu_custom_call.1} parent=5 // pred_fallthru
        _
      %p215 = scmp.lt.s32.totalorder %s20, 2
      // Predicated region
      $region29: #{tpu_custom_call.1} parent=5 // pred_check
        %p216 = pneg %p215
      $region30: #{tpu_custom_call.1} parent=5 // pred_check_branch
        %218 = sbr.rel (%p216) target = $region32
      $region31: #{tpu_custom_call.1} parent=5 // pred_region
        // Predicated region
        $region33: #{tpu_custom_call.1} parent=31 // pred_check
          %p219 = pneg %p40
        $region34: #{tpu_custom_call.1} parent=31 // pred_check_branch
          %221 = sbr.rel (%p219) target = $region36
        $region35: #{tpu_custom_call.1} parent=31 // pred_region
          %s222 = sand.u32 %s30, 1
          %s223 = scalar_lea.sflag [#allocation5], %s222
          %s224 = sand.u32 %s30, 1
          %s225 = smul.addr %s224, 64
          %s226 = scalar_lea.vmem [#allocation4], %s225
          %s228 = ssub.s32 1024, 1024
          %229 = vsyncadd %s223, %s228
          %s230 = smul.addr %s20, 8
          %s231 = smul.addr %s230, 128
          %s232 = scalar_lea.hbm %s0, %s231
          %s233 = sshll.u32 %s226, 4
          %s234 = int_to_ptr.vmem [resolvable:$true] %s233
          %239 = dma.hbm_to_vmem [thread:$0]  %s232, 1024, %s234, %s223, 128, 128, 8
        $region36: #{tpu_custom_call.1} parent=31 // pred_fallthru
          _
      $region32: #{tpu_custom_call.1} parent=5 // pred_fallthru
        _
      %p240 = scmp.le.s32.totalorder 1, %s20
      %p241 = scmp.lt.s32.totalorder %s20, 3
      %p242 = pnand %p240, %p241
      %p243 = pneg %p242
      // Predicated region
      $region37: #{tpu_custom_call.1} parent=5 // pred_check
        _
      $region38: #{tpu_custom_call.1} parent=5 // pred_check_branch
        %245 = sbr.rel (%p242) target = $region40
      $region39: #{tpu_custom_call.1} parent=5 // pred_region
        %s246 = ssub.s32 %s20, 1
        %s247 = sand.u32 %s33, 1
        %s248 = scalar_lea.sflag [#allocation5], %s247
        %s249 = sand.u32 %s33, 1
        %s250 = smul.addr %s249, 64
        %s251 = scalar_lea.vmem [#allocation4], %s250
        // Predicated region
        $region41: #{tpu_custom_call.1} parent=39 // pred_check
          %p252 = pneg %p46
        $region42: #{tpu_custom_call.1} parent=39 // pred_check_branch
          %254 = sbr.rel (%p252) target = $region44
        $region43: #{tpu_custom_call.1} parent=39 // pred_region
          %255 = dma.done %s248, 1024
        $region44: #{tpu_custom_call.1} parent=39 // pred_fallthru
          _
        // Predicated region
        $region45: #{tpu_custom_call.1} parent=39 // pred_check
          %p256 = pneg %p67
        $region46: #{tpu_custom_call.1} parent=39 // pred_check_branch
          %258 = sbr.rel (%p256) target = $region48
        $region47: #{tpu_custom_call.1} parent=39 // pred_region
          %259 = dma.done [#allocation7], 16
        $region48: #{tpu_custom_call.1} parent=39 // pred_fallthru
          _
        // Predicated region
        $region49: #{tpu_custom_call.1} parent=39 // pred_check
          %p260 = pneg %p88
        $region50: #{tpu_custom_call.1} parent=39 // pred_check_branch
          %262 = sbr.rel (%p260) target = $region52
        $region51: #{tpu_custom_call.1} parent=39 // pred_region
          %263 = dma.done [#allocation10], 16
        $region52: #{tpu_custom_call.1} parent=39 // pred_fallthru
          _
        // Predicated region
        $region53: #{tpu_custom_call.1} parent=39 // pred_check
          %p264 = pneg %p109
        $region54: #{tpu_custom_call.1} parent=39 // pred_check_branch
          %266 = sbr.rel (%p264) target = $region56
        $region55: #{tpu_custom_call.1} parent=39 // pred_region
          %267 = dma.done [#allocation10], 16
        $region56: #{tpu_custom_call.1} parent=39 // pred_fallthru
          _
        // Predicated region
        $region57: #{tpu_custom_call.1} parent=39 // pred_check
          %p268 = pneg %p130
        $region58: #{tpu_custom_call.1} parent=39 // pred_check_branch
          %270 = sbr.rel (%p268) target = $region60
        $region59: #{tpu_custom_call.1} parent=39 // pred_region
          %271 = dma.done [#allocation13], 16
        $region60: #{tpu_custom_call.1} parent=39 // pred_fallthru
          _
        %272 = sfence
        %s273 = sand.u32 %s33, 1
        %s274 = scalar_lea.sflag [#allocation5], %s273
        %s275 = sand.u32 %s33, 1
        %s276 = smul.addr %s275, 64
        %s277 = scalar_lea.vmem [#allocation4], %s276
        %p278 = pneg %p46
        %p279 = pneg %p43
        %p280 = pneg %p67
        %p281 = pneg %p64
        %p282 = pneg %p88
        %p283 = pneg %p85
        %p284 = pneg %p109
        %p285 = pneg %p106
        %p286 = pneg %p130
        %p287 = pneg %p127
        %p288 = pneg %p156
        %p289 = pneg %p153
        %s290 = sand.u32 %s143, 1
        %s291 = scalar_lea.sflag [#allocation6], %s290
        %s292 = sand.u32 %s143, 1
        %s293 = smul.addr %s292, 64
        %s294 = scalar_lea.vmem [#allocation14], %s293
        %vm295 = vcmask 146432
        %296 = vst.msk [vmem:[#allocation2] sm:$0xff] %vm295, 0.0
        %297 = vst.msk [vmem:[#allocation2 + $0x8] sm:$0xff] %vm295, 0.0
        %vm298 = vcmask 140288
        %299 = vst.msk [vmem:[#allocation2 + $0x10] sm:$0x3] %vm298, 0.0
        %300 = vst.msk [vmem:[#allocation2 + $0x18] sm:$0xff] %vm295, 0.0
        %301 = vst.msk [vmem:[#allocation2 + $0x20] sm:$0xff] %vm295, 0.0
        %302 = vst.msk [vmem:[#allocation2 + $0x28] sm:$0x3] %vm298, 0.0
        %s303 = scalar_lea.vmem %s251, 32 [#allocation4]
        %v304 = vld [vmem:[%s303] sm:$0xff]
        %v305 = vld [vmem:[%s303 + $0x8] sm:$0xff]
        %v306 = vld [vmem:[%s303 + $0x10] sm:$0xff]
        %v307 = vld [vmem:[%s303 + $0x18] sm:$0xff]
        %312 = vrot.lane.b32.xlu0 %v304, 1
        %v313 = vpop.permute.xlu0 %312
        %314 = vrot.lane.b32.xlu0 %v305, 1
        %v315 = vpop.permute.xlu0 %314
        %316 = vrot.lane.b32.xlu0 %v306, 1
        %v317 = vpop.permute.xlu0 %316
        %318 = vrot.lane.b32.xlu0 %v307, 1
        %v319 = vpop.permute.xlu0 %318
        %vm324 = vcmask 138248
        %325 = vst.msk [vmem:[#allocation2 + $0x1] sm:$0xff] %vm324, %v313
        %326 = vst.msk [vmem:[#allocation2 + $0x9] sm:$0xff] %vm324, %v315
        %327 = vst.msk [vmem:[#allocation2 + $0x19] sm:$0xff] %vm324, %v317
        %328 = vst.msk [vmem:[#allocation2 + $0x21] sm:$0xff] %vm324, %v319
        %s329 = sld [smem:[#allocation9]]
        %v330 = vstv %s329
        %v331 = vadd.f32 %v330, 0.0
        %s332 = sld [smem:[#allocation9 + $0x1]]
        %v333 = vstv %s332
        %v334 = vadd.f32 %v333, 0.0
        %s335 = sld [smem:[#allocation9 + $0x2]]
        %v336 = vstv %s335
        %v337 = vadd.f32 %v336, 0.0
        %s338 = sld [smem:[#allocation9 + $0x3]]
        %v339 = vstv %s338
        %v340 = vadd.f32 %v339, 0.0
        %v341 = vld [vmem:[#allocation2] sm:$0xff]
        %v342 = vld [vmem:[#allocation2 + $0x8] sm:$0xff]
        %s343 = sld [smem:[#allocation8]]
        %v344 = vstv %s343
        %v345 = vmul.f32 %v344, %v341
        %v346 = vmul.f32 %v344, %v342
        %v347 = vadd.f32 %v331, %v345
        %v348 = vadd.f32 %v331, %v346
        %s349 = sld [smem:[#allocation8 + $0x12]]
        %v350 = vstv %s349
        %v351 = vmul.f32 %v350, %v341
        %v352 = vmul.f32 %v350, %v342
        %v353 = vadd.f32 %v334, %v351
        %v354 = vadd.f32 %v334, %v352
        %s355 = sld [smem:[#allocation8 + $0x24]]
        %v356 = vstv %s355
        %v357 = vmul.f32 %v356, %v341
        %v358 = vmul.f32 %v356, %v342
        %v359 = vadd.f32 %v337, %v357
        %v360 = vadd.f32 %v337, %v358
        %s361 = sld [smem:[#allocation8 + $0x36]]
        %v362 = vstv %s361
        %v363 = vmul.f32 %v362, %v341
        %v364 = vmul.f32 %v362, %v342
        %v365 = vadd.f32 %v340, %v363
        %v366 = vadd.f32 %v340, %v364
        %s367 = sld [smem:[#allocation8 + $0x1]]
        %v368 = vstv %s367
        %v369 = vmul.f32 %v368, %v341
        %v370 = vmul.f32 %v368, %v342
        %373 = vrot.lane.b32.xlu0 %v369, 127
        %v374 = vpop.permute.xlu0 %373
        %375 = vrot.lane.b32.xlu0 %v370, 127
        %v376 = vpop.permute.xlu0 %375
        %v379 = vadd.f32 %v347, %v374
        %v380 = vadd.f32 %v348, %v376
        %s381 = sld [smem:[#allocation8 + $0x13]]
        %v382 = vstv %s381
        %v383 = vmul.f32 %v382, %v341
        %v384 = vmul.f32 %v382, %v342
        %387 = vrot.lane.b32.xlu0 %v383, 127
        %v388 = vpop.permute.xlu0 %387
        %389 = vrot.lane.b32.xlu0 %v384, 127
        %v390 = vpop.permute.xlu0 %389
        %v393 = vadd.f32 %v353, %v388
        %v394 = vadd.f32 %v354, %v390
        %s395 = sld [smem:[#allocation8 + $0x25]]
        %v396 = vstv %s395
        %v397 = vmul.f32 %v396, %v341
        %v398 = vmul.f32 %v396, %v342
        %401 = vrot.lane.b32.xlu0 %v397, 127
        %v402 = vpop.permute.xlu0 %401
        %403 = vrot.lane.b32.xlu0 %v398, 127
        %v404 = vpop.permute.xlu0 %403
        %v407 = vadd.f32 %v359, %v402
        %v408 = vadd.f32 %v360, %v404
        %s409 = sld [smem:[#allocation8 + $0x37]]
        %v410 = vstv %s409
        %v411 = vmul.f32 %v410, %v341
        %v412 = vmul.f32 %v410, %v342
        %415 = vrot.lane.b32.xlu0 %v411, 127
        %v416 = vpop.permute.xlu0 %415
        %417 = vrot.lane.b32.xlu0 %v412, 127
        %v418 = vpop.permute.xlu0 %417
        %v421 = vadd.f32 %v365, %v416
        %v422 = vadd.f32 %v366, %v418
        %s423 = sld [smem:[#allocation8 + $0x2]]
        %v424 = vstv %s423
        %v425 = vmul.f32 %v424, %v341
        %v426 = vmul.f32 %v424, %v342
        %429 = vrot.lane.b32.xlu0 %v425, 126
        %v430 = vpop.permute.xlu0 %429
        %431 = vrot.lane.b32.xlu0 %v426, 126
        %v432 = vpop.permute.xlu0 %431
        %v435 = vadd.f32 %v379, %v430
        %v436 = vadd.f32 %v380, %v432
        %s437 = sld [smem:[#allocation8 + $0x14]]
        %v438 = vstv %s437
        %v439 = vmul.f32 %v438, %v341
        %v440 = vmul.f32 %v438, %v342
        %443 = vrot.lane.b32.xlu0 %v439, 126
        %v444 = vpop.permute.xlu0 %443
        %445 = vrot.lane.b32.xlu0 %v440, 126
        %v446 = vpop.permute.xlu0 %445
        %v449 = vadd.f32 %v393, %v444
        %v450 = vadd.f32 %v394, %v446
        %s451 = sld [smem:[#allocation8 + $0x26]]
        %v452 = vstv %s451
        %v453 = vmul.f32 %v452, %v341
        %v454 = vmul.f32 %v452, %v342
        %457 = vrot.lane.b32.xlu0 %v453, 126
        %v458 = vpop.permute.xlu0 %457
        %459 = vrot.lane.b32.xlu0 %v454, 126
        %v460 = vpop.permute.xlu0 %459
        %v463 = vadd.f32 %v407, %v458
        %v464 = vadd.f32 %v408, %v460
        %s465 = sld [smem:[#allocation8 + $0x38]]
        %v466 = vstv %s465
        %v467 = vmul.f32 %v466, %v341
        %v468 = vmul.f32 %v466, %v342
        %471 = vrot.lane.b32.xlu0 %v467, 126
        %v472 = vpop.permute.xlu0 %471
        %473 = vrot.lane.b32.xlu0 %v468, 126
        %v474 = vpop.permute.xlu0 %473
        %v477 = vadd.f32 %v421, %v472
        %v478 = vadd.f32 %v422, %v474
        %v479 = vld [vmem:[#allocation2 + $0x1] sm:$0xff]
        %v480 = vld [vmem:[#allocation2 + $0x9] sm:$0xff]
        %s481 = sld [smem:[#allocation8 + $0x3]]
        %v482 = vstv %s481
        %v483 = vmul.f32 %v482, %v479
        %v484 = vmul.f32 %v482, %v480
        %v485 = vadd.f32 %v435, %v483
        %v486 = vadd.f32 %v436, %v484
        %s487 = sld [smem:[#allocation8 + $0x15]]
        %v488 = vstv %s487
        %v489 = vmul.f32 %v488, %v479
        %v490 = vmul.f32 %v488, %v480
        %v491 = vadd.f32 %v449, %v489
        %v492 = vadd.f32 %v450, %v490
        %s493 = sld [smem:[#allocation8 + $0x27]]
        %v494 = vstv %s493
        %v495 = vmul.f32 %v494, %v479
        %v496 = vmul.f32 %v494, %v480
        %v497 = vadd.f32 %v463, %v495
        %v498 = vadd.f32 %v464, %v496
        %s499 = sld [smem:[#allocation8 + $0x39]]
        %v500 = vstv %s499
        %v501 = vmul.f32 %v500, %v479
        %v502 = vmul.f32 %v500, %v480
        %v503 = vadd.f32 %v477, %v501
        %v504 = vadd.f32 %v478, %v502
        %s505 = sld [smem:[#allocation8 + $0x4]]
        %v506 = vstv %s505
        %v507 = vmul.f32 %v506, %v479
        %v508 = vmul.f32 %v506, %v480
        %511 = vrot.lane.b32.xlu0 %v507, 127
        %v512 = vpop.permute.xlu0 %511
        %513 = vrot.lane.b32.xlu0 %v508, 127
        %v514 = vpop.permute.xlu0 %513
        %v517 = vadd.f32 %v485, %v512
        %v518 = vadd.f32 %v486, %v514
        %s519 = sld [smem:[#allocation8 + $0x16]]
        %v520 = vstv %s519
        %v521 = vmul.f32 %v520, %v479
        %v522 = vmul.f32 %v520, %v480
        %525 = vrot.lane.b32.xlu0 %v521, 127
        %v526 = vpop.permute.xlu0 %525
        %527 = vrot.lane.b32.xlu0 %v522, 127
        %v528 = vpop.permute.xlu0 %527
        %v531 = vadd.f32 %v491, %v526
        %v532 = vadd.f32 %v492, %v528
        %s533 = sld [smem:[#allocation8 + $0x28]]
        %v534 = vstv %s533
        %v535 = vmul.f32 %v534, %v479
        %v536 = vmul.f32 %v534, %v480
        %539 = vrot.lane.b32.xlu0 %v535, 127
        %v540 = vpop.permute.xlu0 %539
        %541 = vrot.lane.b32.xlu0 %v536, 127
        %v542 = vpop.permute.xlu0 %541
        %v545 = vadd.f32 %v497, %v540
        %v546 = vadd.f32 %v498, %v542
        %s547 = sld [smem:[#allocation8 + $0x3a]]
        %v548 = vstv %s547
        %v549 = vmul.f32 %v548, %v479
        %v550 = vmul.f32 %v548, %v480
        %553 = vrot.lane.b32.xlu0 %v549, 127
        %v554 = vpop.permute.xlu0 %553
        %555 = vrot.lane.b32.xlu0 %v550, 127
        %v556 = vpop.permute.xlu0 %555
        %v559 = vadd.f32 %v503, %v554
        %v560 = vadd.f32 %v504, %v556
        %s561 = sld [smem:[#allocation8 + $0x5]]
        %v562 = vstv %s561
        %v563 = vmul.f32 %v562, %v479
        %v564 = vmul.f32 %v562, %v480
        %567 = vrot.lane.b32.xlu0 %v563, 126
        %v568 = vpop.permute.xlu0 %567
        %569 = vrot.lane.b32.xlu0 %v564, 126
        %v570 = vpop.permute.xlu0 %569
        %v573 = vadd.f32 %v517, %v568
        %v574 = vadd.f32 %v518, %v570
        %s575 = sld [smem:[#allocation8 + $0x17]]
        %v576 = vstv %s575
        %v577 = vmul.f32 %v576, %v479
        %v578 = vmul.f32 %v576, %v480
        %581 = vrot.lane.b32.xlu0 %v577, 126
        %v582 = vpop.permute.xlu0 %581
        %583 = vrot.lane.b32.xlu0 %v578, 126
        %v584 = vpop.permute.xlu0 %583
        %v587 = vadd.f32 %v531, %v582
        %v588 = vadd.f32 %v532, %v584
        %s589 = sld [smem:[#allocation8 + $0x29]]
        %v590 = vstv %s589
        %v591 = vmul.f32 %v590, %v479
        %v592 = vmul.f32 %v590, %v480
        %595 = vrot.lane.b32.xlu0 %v591, 126
        %v596 = vpop.permute.xlu0 %595
        %597 = vrot.lane.b32.xlu0 %v592, 126
        %v598 = vpop.permute.xlu0 %597
        %v601 = vadd.f32 %v545, %v596
        %v602 = vadd.f32 %v546, %v598
        %s603 = sld [smem:[#allocation8 + $0x3b]]
        %v604 = vstv %s603
        %v605 = vmul.f32 %v604, %v479
        %v606 = vmul.f32 %v604, %v480
        %609 = vrot.lane.b32.xlu0 %v605, 126
        %v610 = vpop.permute.xlu0 %609
        %611 = vrot.lane.b32.xlu0 %v606, 126
        %v612 = vpop.permute.xlu0 %611
        %v615 = vadd.f32 %v559, %v610
        %v616 = vadd.f32 %v560, %v612
        %v617 = vld [vmem:[#allocation2 + $0x2] sm:$0xff]
        %v618 = vld [vmem:[#allocation2 + $0xa] sm:$0xff]
        %s619 = sld [smem:[#allocation8 + $0x6]]
        %v620 = vstv %s619
        %v621 = vmul.f32 %v620, %v617
        %v622 = vmul.f32 %v620, %v618
        %v623 = vadd.f32 %v573, %v621
        %v624 = vadd.f32 %v574, %v622
        %s625 = sld [smem:[#allocation8 + $0x18]]
        %v626 = vstv %s625
        %v627 = vmul.f32 %v626, %v617
        %v628 = vmul.f32 %v626, %v618
        %v629 = vadd.f32 %v587, %v627
        %v630 = vadd.f32 %v588, %v628
        %s631 = sld [smem:[#allocation8 + $0x2a]]
        %v632 = vstv %s631
        %v633 = vmul.f32 %v632, %v617
        %v634 = vmul.f32 %v632, %v618
        %v635 = vadd.f32 %v601, %v633
        %v636 = vadd.f32 %v602, %v634
        %s637 = sld [smem:[#allocation8 + $0x3c]]
        %v638 = vstv %s637
        %v639 = vmul.f32 %v638, %v617
        %v640 = vmul.f32 %v638, %v618
        %v641 = vadd.f32 %v615, %v639
        %v642 = vadd.f32 %v616, %v640
        %s643 = sld [smem:[#allocation8 + $0x7]]
        %v644 = vstv %s643
        %v645 = vmul.f32 %v644, %v617
        %v646 = vmul.f32 %v644, %v618
        %649 = vrot.lane.b32.xlu0 %v645, 127
        %v650 = vpop.permute.xlu0 %649
        %651 = vrot.lane.b32.xlu0 %v646, 127
        %v652 = vpop.permute.xlu0 %651
        %v655 = vadd.f32 %v623, %v650
        %v656 = vadd.f32 %v624, %v652
        %s657 = sld [smem:[#allocation8 + $0x19]]
        %v658 = vstv %s657
        %v659 = vmul.f32 %v658, %v617
        %v660 = vmul.f32 %v658, %v618
        %663 = vrot.lane.b32.xlu0 %v659, 127
        %v664 = vpop.permute.xlu0 %663
        %665 = vrot.lane.b32.xlu0 %v660, 127
        %v666 = vpop.permute.xlu0 %665
        %v669 = vadd.f32 %v629, %v664
        %v670 = vadd.f32 %v630, %v666
        %s671 = sld [smem:[#allocation8 + $0x2b]]
        %v672 = vstv %s671
        %v673 = vmul.f32 %v672, %v617
        %v674 = vmul.f32 %v672, %v618
        %677 = vrot.lane.b32.xlu0 %v673, 127
        %v678 = vpop.permute.xlu0 %677
        %679 = vrot.lane.b32.xlu0 %v674, 127
        %v680 = vpop.permute.xlu0 %679
        %v683 = vadd.f32 %v635, %v678
        %v684 = vadd.f32 %v636, %v680
        %s685 = sld [smem:[#allocation8 + $0x3d]]
        %v686 = vstv %s685
        %v687 = vmul.f32 %v686, %v617
        %v688 = vmul.f32 %v686, %v618
        %691 = vrot.lane.b32.xlu0 %v687, 127
        %v692 = vpop.permute.xlu0 %691
        %693 = vrot.lane.b32.xlu0 %v688, 127
        %v694 = vpop.permute.xlu0 %693
        %v697 = vadd.f32 %v641, %v692
        %v698 = vadd.f32 %v642, %v694
        %s699 = sld [smem:[#allocation8 + $0x8]]
        %v700 = vstv %s699
        %v701 = vmul.f32 %v700, %v617
        %v702 = vmul.f32 %v700, %v618
        %705 = vrot.lane.b32.xlu0 %v701, 126
        %v706 = vpop.permute.xlu0 %705
        %707 = vrot.lane.b32.xlu0 %v702, 126
        %v708 = vpop.permute.xlu0 %707
        %v711 = vadd.f32 %v655, %v706
        %v712 = vadd.f32 %v656, %v708
        %s713 = sld [smem:[#allocation8 + $0x1a]]
        %v714 = vstv %s713
        %v715 = vmul.f32 %v714, %v617
        %v716 = vmul.f32 %v714, %v618
        %719 = vrot.lane.b32.xlu0 %v715, 126
        %v720 = vpop.permute.xlu0 %719
        %721 = vrot.lane.b32.xlu0 %v716, 126
        %v722 = vpop.permute.xlu0 %721
        %v725 = vadd.f32 %v669, %v720
        %v726 = vadd.f32 %v670, %v722
        %s727 = sld [smem:[#allocation8 + $0x2c]]
        %v728 = vstv %s727
        %v729 = vmul.f32 %v728, %v617
        %v730 = vmul.f32 %v728, %v618
        %733 = vrot.lane.b32.xlu0 %v729, 126
        %v734 = vpop.permute.xlu0 %733
        %735 = vrot.lane.b32.xlu0 %v730, 126
        %v736 = vpop.permute.xlu0 %735
        %v739 = vadd.f32 %v683, %v734
        %v740 = vadd.f32 %v684, %v736
        %s741 = sld [smem:[#allocation8 + $0x3e]]
        %v742 = vstv %s741
        %v743 = vmul.f32 %v742, %v617
        %v744 = vmul.f32 %v742, %v618
        %747 = vrot.lane.b32.xlu0 %v743, 126
        %v748 = vpop.permute.xlu0 %747
        %749 = vrot.lane.b32.xlu0 %v744, 126
        %v750 = vpop.permute.xlu0 %749
        %v753 = vadd.f32 %v697, %v748
        %v754 = vadd.f32 %v698, %v750
        %s755 = scalar_lea.vmem [#allocation2], 24
        %v756 = vld [vmem:[%s755] sm:$0xff]
        %v757 = vld [vmem:[%s755 + $0x8] sm:$0xff]
        %s758 = sld [smem:[#allocation8 + $0x9]]
        %v759 = vstv %s758
        %v760 = vmul.f32 %v759, %v756
        %v761 = vmul.f32 %v759, %v757
        %v762 = vadd.f32 %v711, %v760
        %v763 = vadd.f32 %v712, %v761
        %s764 = sld [smem:[#allocation8 + $0x1b]]
        %v765 = vstv %s764
        %v766 = vmul.f32 %v765, %v756
        %v767 = vmul.f32 %v765, %v757
        %v768 = vadd.f32 %v725, %v766
        %v769 = vadd.f32 %v726, %v767
        %s770 = sld [smem:[#allocation8 + $0x2d]]
        %v771 = vstv %s770
        %v772 = vmul.f32 %v771, %v756
        %v773 = vmul.f32 %v771, %v757
        %v774 = vadd.f32 %v739, %v772
        %v775 = vadd.f32 %v740, %v773
        %s776 = sld [smem:[#allocation8 + $0x3f]]
        %v777 = vstv %s776
        %v778 = vmul.f32 %v777, %v756
        %v779 = vmul.f32 %v777, %v757
        %v780 = vadd.f32 %v753, %v778
        %v781 = vadd.f32 %v754, %v779
        %s782 = sld [smem:[#allocation8 + $0xa]]
        %v783 = vstv %s782
        %v784 = vmul.f32 %v783, %v756
        %v785 = vmul.f32 %v783, %v757
        %788 = vrot.lane.b32.xlu0 %v784, 127
        %v789 = vpop.permute.xlu0 %788
        %790 = vrot.lane.b32.xlu0 %v785, 127
        %v791 = vpop.permute.xlu0 %790
        %v794 = vadd.f32 %v762, %v789
        %v795 = vadd.f32 %v763, %v791
        %s796 = sld [smem:[#allocation8 + $0x1c]]
        %v797 = vstv %s796
        %v798 = vmul.f32 %v797, %v756
        %v799 = vmul.f32 %v797, %v757
        %802 = vrot.lane.b32.xlu0 %v798, 127
        %v803 = vpop.permute.xlu0 %802
        %804 = vrot.lane.b32.xlu0 %v799, 127
        %v805 = vpop.permute.xlu0 %804
        %v808 = vadd.f32 %v768, %v803
        %v809 = vadd.f32 %v769, %v805
        %s810 = sld [smem:[#allocation8 + $0x2e]]
        %v811 = vstv %s810
        %v812 = vmul.f32 %v811, %v756
        %v813 = vmul.f32 %v811, %v757
        %816 = vrot.lane.b32.xlu0 %v812, 127
        %v817 = vpop.permute.xlu0 %816
        %818 = vrot.lane.b32.xlu0 %v813, 127
        %v819 = vpop.permute.xlu0 %818
        %v822 = vadd.f32 %v774, %v817
        %v823 = vadd.f32 %v775, %v819
        %s824 = sld [smem:[#allocation8 + $0x40]]
        %v825 = vstv %s824
        %v826 = vmul.f32 %v825, %v756
        %v827 = vmul.f32 %v825, %v757
        %830 = vrot.lane.b32.xlu0 %v826, 127
        %v831 = vpop.permute.xlu0 %830
        %832 = vrot.lane.b32.xlu0 %v827, 127
        %v833 = vpop.permute.xlu0 %832
        %v836 = vadd.f32 %v780, %v831
        %v837 = vadd.f32 %v781, %v833
        %s838 = sld [smem:[#allocation8 + $0xb]]
        %v839 = vstv %s838
        %v840 = vmul.f32 %v839, %v756
        %v841 = vmul.f32 %v839, %v757
        %844 = vrot.lane.b32.xlu0 %v840, 126
        %v845 = vpop.permute.xlu0 %844
        %846 = vrot.lane.b32.xlu0 %v841, 126
        %v847 = vpop.permute.xlu0 %846
        %v850 = vadd.f32 %v794, %v845
        %v851 = vadd.f32 %v795, %v847
        %s852 = sld [smem:[#allocation8 + $0x1d]]
        %v853 = vstv %s852
        %v854 = vmul.f32 %v853, %v756
        %v855 = vmul.f32 %v853, %v757
        %858 = vrot.lane.b32.xlu0 %v854, 126
        %v859 = vpop.permute.xlu0 %858
        %860 = vrot.lane.b32.xlu0 %v855, 126
        %v861 = vpop.permute.xlu0 %860
        %v864 = vadd.f32 %v808, %v859
        %v865 = vadd.f32 %v809, %v861
        %s866 = sld [smem:[#allocation8 + $0x2f]]
        %v867 = vstv %s866
        %v868 = vmul.f32 %v867, %v756
        %v869 = vmul.f32 %v867, %v757
        %872 = vrot.lane.b32.xlu0 %v868, 126
        %v873 = vpop.permute.xlu0 %872
        %874 = vrot.lane.b32.xlu0 %v869, 126
        %v875 = vpop.permute.xlu0 %874
        %v878 = vadd.f32 %v822, %v873
        %v879 = vadd.f32 %v823, %v875
        %s880 = sld [smem:[#allocation8 + $0x41]]
        %v881 = vstv %s880
        %v882 = vmul.f32 %v881, %v756
        %v883 = vmul.f32 %v881, %v757
        %886 = vrot.lane.b32.xlu0 %v882, 126
        %v887 = vpop.permute.xlu0 %886
        %888 = vrot.lane.b32.xlu0 %v883, 126
        %v889 = vpop.permute.xlu0 %888
        %v892 = vadd.f32 %v836, %v887
        %v893 = vadd.f32 %v837, %v889
        %v894 = vld [vmem:[%s755 + $0x1] sm:$0xff]
        %v895 = vld [vmem:[%s755 + $0x9] sm:$0xff]
        %s896 = sld [smem:[#allocation8 + $0xc]]
        %v897 = vstv %s896
        %v898 = vmul.f32 %v897, %v894
        %v899 = vmul.f32 %v897, %v895
        %v900 = vadd.f32 %v850, %v898
        %v901 = vadd.f32 %v851, %v899
        %s902 = sld [smem:[#allocation8 + $0x1e]]
        %v903 = vstv %s902
        %v904 = vmul.f32 %v903, %v894
        %v905 = vmul.f32 %v903, %v895
        %v906 = vadd.f32 %v864, %v904
        %v907 = vadd.f32 %v865, %v905
        %s908 = sld [smem:[#allocation8 + $0x30]]
        %v909 = vstv %s908
        %v910 = vmul.f32 %v909, %v894
        %v911 = vmul.f32 %v909, %v895
        %v912 = vadd.f32 %v878, %v910
        %v913 = vadd.f32 %v879, %v911
        %s914 = sld [smem:[#allocation8 + $0x42]]
        %v915 = vstv %s914
        %v916 = vmul.f32 %v915, %v894
        %v917 = vmul.f32 %v915, %v895
        %v918 = vadd.f32 %v892, %v916
        %v919 = vadd.f32 %v893, %v917
        %s920 = sld [smem:[#allocation8 + $0xd]]
        %v921 = vstv %s920
        %v922 = vmul.f32 %v921, %v894
        %v923 = vmul.f32 %v921, %v895
        %926 = vrot.lane.b32.xlu0 %v922, 127
        %v927 = vpop.permute.xlu0 %926
        %928 = vrot.lane.b32.xlu0 %v923, 127
        %v929 = vpop.permute.xlu0 %928
        %v932 = vadd.f32 %v900, %v927
        %v933 = vadd.f32 %v901, %v929
        %s934 = sld [smem:[#allocation8 + $0x1f]]
        %v935 = vstv %s934
        %v936 = vmul.f32 %v935, %v894
        %v937 = vmul.f32 %v935, %v895
        %940 = vrot.lane.b32.xlu0 %v936, 127
        %v941 = vpop.permute.xlu0 %940
        %942 = vrot.lane.b32.xlu0 %v937, 127
        %v943 = vpop.permute.xlu0 %942
        %v946 = vadd.f32 %v906, %v941
        %v947 = vadd.f32 %v907, %v943
        %s948 = sld [smem:[#allocation8 + $0x31]]
        %v949 = vstv %s948
        %v950 = vmul.f32 %v949, %v894
        %v951 = vmul.f32 %v949, %v895
        %954 = vrot.lane.b32.xlu0 %v950, 127
        %v955 = vpop.permute.xlu0 %954
        %956 = vrot.lane.b32.xlu0 %v951, 127
        %v957 = vpop.permute.xlu0 %956
        %v960 = vadd.f32 %v912, %v955
        %v961 = vadd.f32 %v913, %v957
        %s962 = sld [smem:[#allocation8 + $0x43]]
        %v963 = vstv %s962
        %v964 = vmul.f32 %v963, %v894
        %v965 = vmul.f32 %v963, %v895
        %968 = vrot.lane.b32.xlu0 %v964, 127
        %v969 = vpop.permute.xlu0 %968
        %970 = vrot.lane.b32.xlu0 %v965, 127
        %v971 = vpop.permute.xlu0 %970
        %v974 = vadd.f32 %v918, %v969
        %v975 = vadd.f32 %v919, %v971
        %s976 = sld [smem:[#allocation8 + $0xe]]
        %v977 = vstv %s976
        %v978 = vmul.f32 %v977, %v894
        %v979 = vmul.f32 %v977, %v895
        %982 = vrot.lane.b32.xlu0 %v978, 126
        %v983 = vpop.permute.xlu0 %982
        %984 = vrot.lane.b32.xlu0 %v979, 126
        %v985 = vpop.permute.xlu0 %984
        %v988 = vadd.f32 %v932, %v983
        %v989 = vadd.f32 %v933, %v985
        %s990 = sld [smem:[#allocation8 + $0x20]]
        %v991 = vstv %s990
        %v992 = vmul.f32 %v991, %v894
        %v993 = vmul.f32 %v991, %v895
        %996 = vrot.lane.b32.xlu0 %v992, 126
        %v997 = vpop.permute.xlu0 %996
        %998 = vrot.lane.b32.xlu0 %v993, 126
        %v999 = vpop.permute.xlu0 %998
        %v1002 = vadd.f32 %v946, %v997
        %v1003 = vadd.f32 %v947, %v999
        %s1004 = sld [smem:[#allocation8 + $0x32]]
        %v1005 = vstv %s1004
        %v1006 = vmul.f32 %v1005, %v894
        %v1007 = vmul.f32 %v1005, %v895
        %1010 = vrot.lane.b32.xlu0 %v1006, 126
        %v1011 = vpop.permute.xlu0 %1010
        %1012 = vrot.lane.b32.xlu0 %v1007, 126
        %v1013 = vpop.permute.xlu0 %1012
        %v1016 = vadd.f32 %v960, %v1011
        %v1017 = vadd.f32 %v961, %v1013
        %s1018 = sld [smem:[#allocation8 + $0x44]]
        %v1019 = vstv %s1018
        %v1020 = vmul.f32 %v1019, %v894
        %v1021 = vmul.f32 %v1019, %v895
        %1024 = vrot.lane.b32.xlu0 %v1020, 126
        %v1025 = vpop.permute.xlu0 %1024
        %1026 = vrot.lane.b32.xlu0 %v1021, 126
        %v1027 = vpop.permute.xlu0 %1026
        %v1030 = vadd.f32 %v974, %v1025
        %v1031 = vadd.f32 %v975, %v1027
        %v1032 = vld [vmem:[%s755 + $0x2] sm:$0xff]
        %v1033 = vld [vmem:[%s755 + $0xa] sm:$0xff]
        %s1034 = sld [smem:[#allocation8 + $0xf]]
        %v1035 = vstv %s1034
        %v1036 = vmul.f32 %v1035, %v1032
        %v1037 = vmul.f32 %v1035, %v1033
        %v1038 = vadd.f32 %v988, %v1036
        %v1039 = vadd.f32 %v989, %v1037
        %s1040 = sld [smem:[#allocation8 + $0x21]]
        %v1041 = vstv %s1040
        %v1042 = vmul.f32 %v1041, %v1032
        %v1043 = vmul.f32 %v1041, %v1033
        %v1044 = vadd.f32 %v1002, %v1042
        %v1045 = vadd.f32 %v1003, %v1043
        %s1046 = sld [smem:[#allocation8 + $0x33]]
        %v1047 = vstv %s1046
        %v1048 = vmul.f32 %v1047, %v1032
        %v1049 = vmul.f32 %v1047, %v1033
        %v1050 = vadd.f32 %v1016, %v1048
        %v1051 = vadd.f32 %v1017, %v1049
        %s1052 = sld [smem:[#allocation8 + $0x45]]
        %v1053 = vstv %s1052
        %v1054 = vmul.f32 %v1053, %v1032
        %v1055 = vmul.f32 %v1053, %v1033
        %v1056 = vadd.f32 %v1030, %v1054
        %v1057 = vadd.f32 %v1031, %v1055
        %s1058 = sld [smem:[#allocation8 + $0x10]]
        %v1059 = vstv %s1058
        %v1060 = vmul.f32 %v1059, %v1032
        %v1061 = vmul.f32 %v1059, %v1033
        %1064 = vrot.lane.b32.xlu0 %v1060, 127
        %v1065 = vpop.permute.xlu0 %1064
        %1066 = vrot.lane.b32.xlu0 %v1061, 127
        %v1067 = vpop.permute.xlu0 %1066
        %v1070 = vadd.f32 %v1038, %v1065
        %v1071 = vadd.f32 %v1039, %v1067
        %s1072 = sld [smem:[#allocation8 + $0x22]]
        %v1073 = vstv %s1072
        %v1074 = vmul.f32 %v1073, %v1032
        %v1075 = vmul.f32 %v1073, %v1033
        %1078 = vrot.lane.b32.xlu0 %v1074, 127
        %v1079 = vpop.permute.xlu0 %1078
        %1080 = vrot.lane.b32.xlu0 %v1075, 127
        %v1081 = vpop.permute.xlu0 %1080
        %v1084 = vadd.f32 %v1044, %v1079
        %v1085 = vadd.f32 %v1045, %v1081
        %s1086 = sld [smem:[#allocation8 + $0x34]]
        %v1087 = vstv %s1086
        %v1088 = vmul.f32 %v1087, %v1032
        %v1089 = vmul.f32 %v1087, %v1033
        %1092 = vrot.lane.b32.xlu0 %v1088, 127
        %v1093 = vpop.permute.xlu0 %1092
        %1094 = vrot.lane.b32.xlu0 %v1089, 127
        %v1095 = vpop.permute.xlu0 %1094
        %v1098 = vadd.f32 %v1050, %v1093
        %v1099 = vadd.f32 %v1051, %v1095
        %s1100 = sld [smem:[#allocation8 + $0x46]]
        %v1101 = vstv %s1100
        %v1102 = vmul.f32 %v1101, %v1032
        %v1103 = vmul.f32 %v1101, %v1033
        %1106 = vrot.lane.b32.xlu0 %v1102, 127
        %v1107 = vpop.permute.xlu0 %1106
        %1108 = vrot.lane.b32.xlu0 %v1103, 127
        %v1109 = vpop.permute.xlu0 %1108
        %v1112 = vadd.f32 %v1056, %v1107
        %v1113 = vadd.f32 %v1057, %v1109
        %s1114 = sld [smem:[#allocation8 + $0x11]]
        %v1115 = vstv %s1114
        %v1116 = vmul.f32 %v1115, %v1032
        %v1117 = vmul.f32 %v1115, %v1033
        %1120 = vrot.lane.b32.xlu0 %v1116, 126
        %v1121 = vpop.permute.xlu0 %1120
        %1122 = vrot.lane.b32.xlu0 %v1117, 126
        %v1123 = vpop.permute.xlu0 %1122
        %v1126 = vadd.f32 %v1070, %v1121
        %v1127 = vadd.f32 %v1071, %v1123
        %s1128 = sld [smem:[#allocation8 + $0x23]]
        %v1129 = vstv %s1128
        %v1130 = vmul.f32 %v1129, %v1032
        %v1131 = vmul.f32 %v1129, %v1033
        %1134 = vrot.lane.b32.xlu0 %v1130, 126
        %v1135 = vpop.permute.xlu0 %1134
        %1136 = vrot.lane.b32.xlu0 %v1131, 126
        %v1137 = vpop.permute.xlu0 %1136
        %v1140 = vadd.f32 %v1084, %v1135
        %v1141 = vadd.f32 %v1085, %v1137
        %s1142 = sld [smem:[#allocation8 + $0x35]]
        %v1143 = vstv %s1142
        %v1144 = vmul.f32 %v1143, %v1032
        %v1145 = vmul.f32 %v1143, %v1033
        %1148 = vrot.lane.b32.xlu0 %v1144, 126
        %v1149 = vpop.permute.xlu0 %1148
        %1150 = vrot.lane.b32.xlu0 %v1145, 126
        %v1151 = vpop.permute.xlu0 %1150
        %v1154 = vadd.f32 %v1098, %v1149
        %v1155 = vadd.f32 %v1099, %v1151
        %s1156 = sld [smem:[#allocation8 + $0x47]]
        %v1157 = vstv %s1156
        %v1158 = vmul.f32 %v1157, %v1032
        %v1159 = vmul.f32 %v1157, %v1033
        %1162 = vrot.lane.b32.xlu0 %v1158, 126
        %v1163 = vpop.permute.xlu0 %1162
        %1164 = vrot.lane.b32.xlu0 %v1159, 126
        %v1165 = vpop.permute.xlu0 %1164
        %v1168 = vadd.f32 %v1112, %v1163
        %v1169 = vadd.f32 %v1113, %v1165
        %v1170 = vld [vmem:[%s251] sm:$0xff]
        %v1171 = vld [vmem:[%s251 + $0x8] sm:$0xff]
        %v1172 = vadd.f32 %v1170, %v1126
        %v1173 = vadd.f32 %v1171, %v1127
        %v1174 = vsub.f32 %v1172, %v1154
        %v1175 = vsub.f32 %v1173, %v1155
        %s1176 = scalar_lea.vmem %s251, 16 [#allocation4]
        %v1177 = vld [vmem:[%s1176] sm:$0xff]
        %v1178 = vld [vmem:[%s1176 + $0x8] sm:$0xff]
        %v1179 = vadd.f32 %v1177, %v1140
        %v1180 = vadd.f32 %v1178, %v1141
        %v1181 = vsub.f32 %v1179, %v1168
        %v1182 = vsub.f32 %v1180, %v1169
        %1183 = vst.msk [vmem:[#allocation3] sm:$0xff] %vm295, 0.0
        %1184 = vst.msk [vmem:[#allocation3 + $0x8] sm:$0xff] %vm295, 0.0
        %1185 = vst.msk [vmem:[#allocation3 + $0x10] sm:$0x3] %vm298, 0.0
        %1186 = vst.msk [vmem:[#allocation3 + $0x18] sm:$0xff] %vm295, 0.0
        %1187 = vst.msk [vmem:[#allocation3 + $0x20] sm:$0xff] %vm295, 0.0
        %1188 = vst.msk [vmem:[#allocation3 + $0x28] sm:$0x3] %vm298, 0.0
        %1191 = vrot.lane.b32.xlu0 %v1174, 1
        %v1192 = vpop.permute.xlu0 %1191
        %1193 = vrot.lane.b32.xlu0 %v1175, 1
        %v1194 = vpop.permute.xlu0 %1193
        %1197 = vst.msk [vmem:[#allocation3 + $0x1] sm:$0xff] %vm324, %v1192
        %1198 = vst.msk [vmem:[#allocation3 + $0x9] sm:$0xff] %vm324, %v1194
        %vm1199 = vcmask 130048
        %1200 = vst.msk [vmem:[%s294] sm:$0xff] %vm1199, %v1174
        %1201 = vst.msk [vmem:[%s294 + $0x8] sm:$0xff] %vm1199, %v1175
        %1204 = vrot.lane.b32.xlu0 %v1181, 1
        %v1205 = vpop.permute.xlu0 %1204
        %1206 = vrot.lane.b32.xlu0 %v1182, 1
        %v1207 = vpop.permute.xlu0 %1206
        %s1210 = scalar_lea.vmem [#allocation3], 24
        %1211 = vst.msk [vmem:[%s1210 + $0x1] sm:$0xff] %vm324, %v1205
        %1212 = vst.msk [vmem:[%s1210 + $0x9] sm:$0xff] %vm324, %v1207
        %s1213 = scalar_lea.vmem %s294, 16 [#allocation14]
        %1214 = vst.msk [vmem:[%s1213] sm:$0xff] %vm1199, %v1181
        %1215 = vst.msk [vmem:[%s1213 + $0x8] sm:$0xff] %vm1199, %v1182
        %s1216 = sld [smem:[#allocation12]]
        %v1217 = vstv %s1216
        %v1218 = vadd.f32 %v1217, 0.0
        %s1219 = sld [smem:[#allocation12 + $0x1]]
        %v1220 = vstv %s1219
        %v1221 = vadd.f32 %v1220, 0.0
        %s1222 = sld [smem:[#allocation12 + $0x2]]
        %v1223 = vstv %s1222
        %v1224 = vadd.f32 %v1223, 0.0
        %s1225 = sld [smem:[#allocation12 + $0x3]]
        %v1226 = vstv %s1225
        %v1227 = vadd.f32 %v1226, 0.0
        %v1228 = vld [vmem:[#allocation3] sm:$0xff]
        %v1229 = vld [vmem:[#allocation3 + $0x8] sm:$0xff]
        %s1230 = sld [smem:[#allocation11]]
        %v1231 = vstv %s1230
        %v1232 = vmul.f32 %v1231, %v1228
        %v1233 = vmul.f32 %v1231, %v1229
        %v1234 = vadd.f32 %v1218, %v1232
        %v1235 = vadd.f32 %v1218, %v1233
        %s1236 = sld [smem:[#allocation11 + $0x12]]
        %v1237 = vstv %s1236
        %v1238 = vmul.f32 %v1237, %v1228
        %v1239 = vmul.f32 %v1237, %v1229
        %v1240 = vadd.f32 %v1221, %v1238
        %v1241 = vadd.f32 %v1221, %v1239
        %s1242 = sld [smem:[#allocation11 + $0x24]]
        %v1243 = vstv %s1242
        %v1244 = vmul.f32 %v1243, %v1228
        %v1245 = vmul.f32 %v1243, %v1229
        %v1246 = vadd.f32 %v1224, %v1244
        %v1247 = vadd.f32 %v1224, %v1245
        %s1248 = sld [smem:[#allocation11 + $0x36]]
        %v1249 = vstv %s1248
        %v1250 = vmul.f32 %v1249, %v1228
        %v1251 = vmul.f32 %v1249, %v1229
        %v1252 = vadd.f32 %v1227, %v1250
        %v1253 = vadd.f32 %v1227, %v1251
        %s1254 = sld [smem:[#allocation11 + $0x1]]
        %v1255 = vstv %s1254
        %v1256 = vmul.f32 %v1255, %v1228
        %v1257 = vmul.f32 %v1255, %v1229
        %1260 = vrot.lane.b32.xlu0 %v1256, 127
        %v1261 = vpop.permute.xlu0 %1260
        %1262 = vrot.lane.b32.xlu0 %v1257, 127
        %v1263 = vpop.permute.xlu0 %1262
        %v1266 = vadd.f32 %v1234, %v1261
        %v1267 = vadd.f32 %v1235, %v1263
        %s1268 = sld [smem:[#allocation11 + $0x13]]
        %v1269 = vstv %s1268
        %v1270 = vmul.f32 %v1269, %v1228
        %v1271 = vmul.f32 %v1269, %v1229
        %1274 = vrot.lane.b32.xlu0 %v1270, 127
        %v1275 = vpop.permute.xlu0 %1274
        %1276 = vrot.lane.b32.xlu0 %v1271, 127
        %v1277 = vpop.permute.xlu0 %1276
        %v1280 = vadd.f32 %v1240, %v1275
        %v1281 = vadd.f32 %v1241, %v1277
        %s1282 = sld [smem:[#allocation11 + $0x25]]
        %v1283 = vstv %s1282
        %v1284 = vmul.f32 %v1283, %v1228
        %v1285 = vmul.f32 %v1283, %v1229
        %1288 = vrot.lane.b32.xlu0 %v1284, 127
        %v1289 = vpop.permute.xlu0 %1288
        %1290 = vrot.lane.b32.xlu0 %v1285, 127
        %v1291 = vpop.permute.xlu0 %1290
        %v1294 = vadd.f32 %v1246, %v1289
        %v1295 = vadd.f32 %v1247, %v1291
        %s1296 = sld [smem:[#allocation11 + $0x37]]
        %v1297 = vstv %s1296
        %v1298 = vmul.f32 %v1297, %v1228
        %v1299 = vmul.f32 %v1297, %v1229
        %1302 = vrot.lane.b32.xlu0 %v1298, 127
        %v1303 = vpop.permute.xlu0 %1302
        %1304 = vrot.lane.b32.xlu0 %v1299, 127
        %v1305 = vpop.permute.xlu0 %1304
        %v1308 = vadd.f32 %v1252, %v1303
        %v1309 = vadd.f32 %v1253, %v1305
        %s1310 = sld [smem:[#allocation11 + $0x2]]
        %v1311 = vstv %s1310
        %v1312 = vmul.f32 %v1311, %v1228
        %v1313 = vmul.f32 %v1311, %v1229
        %1316 = vrot.lane.b32.xlu0 %v1312, 126
        %v1317 = vpop.permute.xlu0 %1316
        %1318 = vrot.lane.b32.xlu0 %v1313, 126
        %v1319 = vpop.permute.xlu0 %1318
        %v1322 = vadd.f32 %v1266, %v1317
        %v1323 = vadd.f32 %v1267, %v1319
        %s1324 = sld [smem:[#allocation11 + $0x14]]
        %v1325 = vstv %s1324
        %v1326 = vmul.f32 %v1325, %v1228
        %v1327 = vmul.f32 %v1325, %v1229
        %1330 = vrot.lane.b32.xlu0 %v1326, 126
        %v1331 = vpop.permute.xlu0 %1330
        %1332 = vrot.lane.b32.xlu0 %v1327, 126
        %v1333 = vpop.permute.xlu0 %1332
        %v1336 = vadd.f32 %v1280, %v1331
        %v1337 = vadd.f32 %v1281, %v1333
        %s1338 = sld [smem:[#allocation11 + $0x26]]
        %v1339 = vstv %s1338
        %v1340 = vmul.f32 %v1339, %v1228
        %v1341 = vmul.f32 %v1339, %v1229
        %1344 = vrot.lane.b32.xlu0 %v1340, 126
        %v1345 = vpop.permute.xlu0 %1344
        %1346 = vrot.lane.b32.xlu0 %v1341, 126
        %v1347 = vpop.permute.xlu0 %1346
        %v1350 = vadd.f32 %v1294, %v1345
        %v1351 = vadd.f32 %v1295, %v1347
        %s1352 = sld [smem:[#allocation11 + $0x38]]
        %v1353 = vstv %s1352
        %v1354 = vmul.f32 %v1353, %v1228
        %v1355 = vmul.f32 %v1353, %v1229
        %1358 = vrot.lane.b32.xlu0 %v1354, 126
        %v1359 = vpop.permute.xlu0 %1358
        %1360 = vrot.lane.b32.xlu0 %v1355, 126
        %v1361 = vpop.permute.xlu0 %1360
        %v1364 = vadd.f32 %v1308, %v1359
        %v1365 = vadd.f32 %v1309, %v1361
        %v1366 = vld [vmem:[#allocation3 + $0x1] sm:$0xff]
        %v1367 = vld [vmem:[#allocation3 + $0x9] sm:$0xff]
        %s1368 = sld [smem:[#allocation11 + $0x3]]
        %v1369 = vstv %s1368
        %v1370 = vmul.f32 %v1369, %v1366
        %v1371 = vmul.f32 %v1369, %v1367
        %v1372 = vadd.f32 %v1322, %v1370
        %v1373 = vadd.f32 %v1323, %v1371
        %s1374 = sld [smem:[#allocation11 + $0x15]]
        %v1375 = vstv %s1374
        %v1376 = vmul.f32 %v1375, %v1366
        %v1377 = vmul.f32 %v1375, %v1367
        %v1378 = vadd.f32 %v1336, %v1376
        %v1379 = vadd.f32 %v1337, %v1377
        %s1380 = sld [smem:[#allocation11 + $0x27]]
        %v1381 = vstv %s1380
        %v1382 = vmul.f32 %v1381, %v1366
        %v1383 = vmul.f32 %v1381, %v1367
        %v1384 = vadd.f32 %v1350, %v1382
        %v1385 = vadd.f32 %v1351, %v1383
        %s1386 = sld [smem:[#allocation11 + $0x39]]
        %v1387 = vstv %s1386
        %v1388 = vmul.f32 %v1387, %v1366
        %v1389 = vmul.f32 %v1387, %v1367
        %v1390 = vadd.f32 %v1364, %v1388
        %v1391 = vadd.f32 %v1365, %v1389
        %s1392 = sld [smem:[#allocation11 + $0x4]]
        %v1393 = vstv %s1392
        %v1394 = vmul.f32 %v1393, %v1366
        %v1395 = vmul.f32 %v1393, %v1367
        %1398 = vrot.lane.b32.xlu0 %v1394, 127
        %v1399 = vpop.permute.xlu0 %1398
        %1400 = vrot.lane.b32.xlu0 %v1395, 127
        %v1401 = vpop.permute.xlu0 %1400
        %v1404 = vadd.f32 %v1372, %v1399
        %v1405 = vadd.f32 %v1373, %v1401
        %s1406 = sld [smem:[#allocation11 + $0x16]]
        %v1407 = vstv %s1406
        %v1408 = vmul.f32 %v1407, %v1366
        %v1409 = vmul.f32 %v1407, %v1367
        %1412 = vrot.lane.b32.xlu0 %v1408, 127
        %v1413 = vpop.permute.xlu0 %1412
        %1414 = vrot.lane.b32.xlu0 %v1409, 127
        %v1415 = vpop.permute.xlu0 %1414
        %v1418 = vadd.f32 %v1378, %v1413
        %v1419 = vadd.f32 %v1379, %v1415
        %s1420 = sld [smem:[#allocation11 + $0x28]]
        %v1421 = vstv %s1420
        %v1422 = vmul.f32 %v1421, %v1366
        %v1423 = vmul.f32 %v1421, %v1367
        %1426 = vrot.lane.b32.xlu0 %v1422, 127
        %v1427 = vpop.permute.xlu0 %1426
        %1428 = vrot.lane.b32.xlu0 %v1423, 127
        %v1429 = vpop.permute.xlu0 %1428
        %v1432 = vadd.f32 %v1384, %v1427
        %v1433 = vadd.f32 %v1385, %v1429
        %s1434 = sld [smem:[#allocation11 + $0x3a]]
        %v1435 = vstv %s1434
        %v1436 = vmul.f32 %v1435, %v1366
        %v1437 = vmul.f32 %v1435, %v1367
        %1440 = vrot.lane.b32.xlu0 %v1436, 127
        %v1441 = vpop.permute.xlu0 %1440
        %1442 = vrot.lane.b32.xlu0 %v1437, 127
        %v1443 = vpop.permute.xlu0 %1442
        %v1446 = vadd.f32 %v1390, %v1441
        %v1447 = vadd.f32 %v1391, %v1443
        %s1448 = sld [smem:[#allocation11 + $0x5]]
        %v1449 = vstv %s1448
        %v1450 = vmul.f32 %v1449, %v1366
        %v1451 = vmul.f32 %v1449, %v1367
        %1454 = vrot.lane.b32.xlu0 %v1450, 126
        %v1455 = vpop.permute.xlu0 %1454
        %1456 = vrot.lane.b32.xlu0 %v1451, 126
        %v1457 = vpop.permute.xlu0 %1456
        %v1460 = vadd.f32 %v1404, %v1455
        %v1461 = vadd.f32 %v1405, %v1457
        %s1462 = sld [smem:[#allocation11 + $0x17]]
        %v1463 = vstv %s1462
        %v1464 = vmul.f32 %v1463, %v1366
        %v1465 = vmul.f32 %v1463, %v1367
        %1468 = vrot.lane.b32.xlu0 %v1464, 126
        %v1469 = vpop.permute.xlu0 %1468
        %1470 = vrot.lane.b32.xlu0 %v1465, 126
        %v1471 = vpop.permute.xlu0 %1470
        %v1474 = vadd.f32 %v1418, %v1469
        %v1475 = vadd.f32 %v1419, %v1471
        %s1476 = sld [smem:[#allocation11 + $0x29]]
        %v1477 = vstv %s1476
        %v1478 = vmul.f32 %v1477, %v1366
        %v1479 = vmul.f32 %v1477, %v1367
        %1482 = vrot.lane.b32.xlu0 %v1478, 126
        %v1483 = vpop.permute.xlu0 %1482
        %1484 = vrot.lane.b32.xlu0 %v1479, 126
        %v1485 = vpop.permute.xlu0 %1484
        %v1488 = vadd.f32 %v1432, %v1483
        %v1489 = vadd.f32 %v1433, %v1485
        %s1490 = sld [smem:[#allocation11 + $0x3b]]
        %v1491 = vstv %s1490
        %v1492 = vmul.f32 %v1491, %v1366
        %v1493 = vmul.f32 %v1491, %v1367
        %1496 = vrot.lane.b32.xlu0 %v1492, 126
        %v1497 = vpop.permute.xlu0 %1496
        %1498 = vrot.lane.b32.xlu0 %v1493, 126
        %v1499 = vpop.permute.xlu0 %1498
        %v1502 = vadd.f32 %v1446, %v1497
        %v1503 = vadd.f32 %v1447, %v1499
        %v1504 = vld [vmem:[#allocation3 + $0x2] sm:$0xff]
        %v1505 = vld [vmem:[#allocation3 + $0xa] sm:$0xff]
        %s1506 = sld [smem:[#allocation11 + $0x6]]
        %v1507 = vstv %s1506
        %v1508 = vmul.f32 %v1507, %v1504
        %v1509 = vmul.f32 %v1507, %v1505
        %v1510 = vadd.f32 %v1460, %v1508
        %v1511 = vadd.f32 %v1461, %v1509
        %s1512 = sld [smem:[#allocation11 + $0x18]]
        %v1513 = vstv %s1512
        %v1514 = vmul.f32 %v1513, %v1504
        %v1515 = vmul.f32 %v1513, %v1505
        %v1516 = vadd.f32 %v1474, %v1514
        %v1517 = vadd.f32 %v1475, %v1515
        %s1518 = sld [smem:[#allocation11 + $0x2a]]
        %v1519 = vstv %s1518
        %v1520 = vmul.f32 %v1519, %v1504
        %v1521 = vmul.f32 %v1519, %v1505
        %v1522 = vadd.f32 %v1488, %v1520
        %v1523 = vadd.f32 %v1489, %v1521
        %s1524 = sld [smem:[#allocation11 + $0x3c]]
        %v1525 = vstv %s1524
        %v1526 = vmul.f32 %v1525, %v1504
        %v1527 = vmul.f32 %v1525, %v1505
        %v1528 = vadd.f32 %v1502, %v1526
        %v1529 = vadd.f32 %v1503, %v1527
        %s1530 = sld [smem:[#allocation11 + $0x7]]
        %v1531 = vstv %s1530
        %v1532 = vmul.f32 %v1531, %v1504
        %v1533 = vmul.f32 %v1531, %v1505
        %1536 = vrot.lane.b32.xlu0 %v1532, 127
        %v1537 = vpop.permute.xlu0 %1536
        %1538 = vrot.lane.b32.xlu0 %v1533, 127
        %v1539 = vpop.permute.xlu0 %1538
        %v1542 = vadd.f32 %v1510, %v1537
        %v1543 = vadd.f32 %v1511, %v1539
        %s1544 = sld [smem:[#allocation11 + $0x19]]
        %v1545 = vstv %s1544
        %v1546 = vmul.f32 %v1545, %v1504
        %v1547 = vmul.f32 %v1545, %v1505
        %1550 = vrot.lane.b32.xlu0 %v1546, 127
        %v1551 = vpop.permute.xlu0 %1550
        %1552 = vrot.lane.b32.xlu0 %v1547, 127
        %v1553 = vpop.permute.xlu0 %1552
        %v1556 = vadd.f32 %v1516, %v1551
        %v1557 = vadd.f32 %v1517, %v1553
        %s1558 = sld [smem:[#allocation11 + $0x2b]]
        %v1559 = vstv %s1558
        %v1560 = vmul.f32 %v1559, %v1504
        %v1561 = vmul.f32 %v1559, %v1505
        %1564 = vrot.lane.b32.xlu0 %v1560, 127
        %v1565 = vpop.permute.xlu0 %1564
        %1566 = vrot.lane.b32.xlu0 %v1561, 127
        %v1567 = vpop.permute.xlu0 %1566
        %v1570 = vadd.f32 %v1522, %v1565
        %v1571 = vadd.f32 %v1523, %v1567
        %s1572 = sld [smem:[#allocation11 + $0x3d]]
        %v1573 = vstv %s1572
        %v1574 = vmul.f32 %v1573, %v1504
        %v1575 = vmul.f32 %v1573, %v1505
        %1578 = vrot.lane.b32.xlu0 %v1574, 127
        %v1579 = vpop.permute.xlu0 %1578
        %1580 = vrot.lane.b32.xlu0 %v1575, 127
        %v1581 = vpop.permute.xlu0 %1580
        %v1584 = vadd.f32 %v1528, %v1579
        %v1585 = vadd.f32 %v1529, %v1581
        %s1586 = sld [smem:[#allocation11 + $0x8]]
        %v1587 = vstv %s1586
        %v1588 = vmul.f32 %v1587, %v1504
        %v1589 = vmul.f32 %v1587, %v1505
        %1592 = vrot.lane.b32.xlu0 %v1588, 126
        %v1593 = vpop.permute.xlu0 %1592
        %1594 = vrot.lane.b32.xlu0 %v1589, 126
        %v1595 = vpop.permute.xlu0 %1594
        %v1598 = vadd.f32 %v1542, %v1593
        %v1599 = vadd.f32 %v1543, %v1595
        %s1600 = sld [smem:[#allocation11 + $0x1a]]
        %v1601 = vstv %s1600
        %v1602 = vmul.f32 %v1601, %v1504
        %v1603 = vmul.f32 %v1601, %v1505
        %1606 = vrot.lane.b32.xlu0 %v1602, 126
        %v1607 = vpop.permute.xlu0 %1606
        %1608 = vrot.lane.b32.xlu0 %v1603, 126
        %v1609 = vpop.permute.xlu0 %1608
        %v1612 = vadd.f32 %v1556, %v1607
        %v1613 = vadd.f32 %v1557, %v1609
        %s1614 = sld [smem:[#allocation11 + $0x2c]]
        %v1615 = vstv %s1614
        %v1616 = vmul.f32 %v1615, %v1504
        %v1617 = vmul.f32 %v1615, %v1505
        %1620 = vrot.lane.b32.xlu0 %v1616, 126
        %v1621 = vpop.permute.xlu0 %1620
        %1622 = vrot.lane.b32.xlu0 %v1617, 126
        %v1623 = vpop.permute.xlu0 %1622
        %v1626 = vadd.f32 %v1570, %v1621
        %v1627 = vadd.f32 %v1571, %v1623
        %s1628 = sld [smem:[#allocation11 + $0x3e]]
        %v1629 = vstv %s1628
        %v1630 = vmul.f32 %v1629, %v1504
        %v1631 = vmul.f32 %v1629, %v1505
        %1634 = vrot.lane.b32.xlu0 %v1630, 126
        %v1635 = vpop.permute.xlu0 %1634
        %1636 = vrot.lane.b32.xlu0 %v1631, 126
        %v1637 = vpop.permute.xlu0 %1636
        %v1640 = vadd.f32 %v1584, %v1635
        %v1641 = vadd.f32 %v1585, %v1637
        %v1642 = vld [vmem:[%s1210] sm:$0xff]
        %v1643 = vld [vmem:[%s1210 + $0x8] sm:$0xff]
        %s1644 = sld [smem:[#allocation11 + $0x9]]
        %v1645 = vstv %s1644
        %v1646 = vmul.f32 %v1645, %v1642
        %v1647 = vmul.f32 %v1645, %v1643
        %v1648 = vadd.f32 %v1598, %v1646
        %v1649 = vadd.f32 %v1599, %v1647
        %s1650 = sld [smem:[#allocation11 + $0x1b]]
        %v1651 = vstv %s1650
        %v1652 = vmul.f32 %v1651, %v1642
        %v1653 = vmul.f32 %v1651, %v1643
        %v1654 = vadd.f32 %v1612, %v1652
        %v1655 = vadd.f32 %v1613, %v1653
        %s1656 = sld [smem:[#allocation11 + $0x2d]]
        %v1657 = vstv %s1656
        %v1658 = vmul.f32 %v1657, %v1642
        %v1659 = vmul.f32 %v1657, %v1643
        %v1660 = vadd.f32 %v1626, %v1658
        %v1661 = vadd.f32 %v1627, %v1659
        %s1662 = sld [smem:[#allocation11 + $0x3f]]
        %v1663 = vstv %s1662
        %v1664 = vmul.f32 %v1663, %v1642
        %v1665 = vmul.f32 %v1663, %v1643
        %v1666 = vadd.f32 %v1640, %v1664
        %v1667 = vadd.f32 %v1641, %v1665
        %s1668 = sld [smem:[#allocation11 + $0xa]]
        %v1669 = vstv %s1668
        %v1670 = vmul.f32 %v1669, %v1642
        %v1671 = vmul.f32 %v1669, %v1643
        %1674 = vrot.lane.b32.xlu0 %v1670, 127
        %v1675 = vpop.permute.xlu0 %1674
        %1676 = vrot.lane.b32.xlu0 %v1671, 127
        %v1677 = vpop.permute.xlu0 %1676
        %v1680 = vadd.f32 %v1648, %v1675
        %v1681 = vadd.f32 %v1649, %v1677
        %s1682 = sld [smem:[#allocation11 + $0x1c]]
        %v1683 = vstv %s1682
        %v1684 = vmul.f32 %v1683, %v1642
        %v1685 = vmul.f32 %v1683, %v1643
        %1688 = vrot.lane.b32.xlu0 %v1684, 127
        %v1689 = vpop.permute.xlu0 %1688
        %1690 = vrot.lane.b32.xlu0 %v1685, 127
        %v1691 = vpop.permute.xlu0 %1690
        %v1694 = vadd.f32 %v1654, %v1689
        %v1695 = vadd.f32 %v1655, %v1691
        %s1696 = sld [smem:[#allocation11 + $0x2e]]
        %v1697 = vstv %s1696
        %v1698 = vmul.f32 %v1697, %v1642
        %v1699 = vmul.f32 %v1697, %v1643
        %1702 = vrot.lane.b32.xlu0 %v1698, 127
        %v1703 = vpop.permute.xlu0 %1702
        %1704 = vrot.lane.b32.xlu0 %v1699, 127
        %v1705 = vpop.permute.xlu0 %1704
        %v1708 = vadd.f32 %v1660, %v1703
        %v1709 = vadd.f32 %v1661, %v1705
        %s1710 = sld [smem:[#allocation11 + $0x40]]
        %v1711 = vstv %s1710
        %v1712 = vmul.f32 %v1711, %v1642
        %v1713 = vmul.f32 %v1711, %v1643
        %1716 = vrot.lane.b32.xlu0 %v1712, 127
        %v1717 = vpop.permute.xlu0 %1716
        %1718 = vrot.lane.b32.xlu0 %v1713, 127
        %v1719 = vpop.permute.xlu0 %1718
        %v1722 = vadd.f32 %v1666, %v1717
        %v1723 = vadd.f32 %v1667, %v1719
        %s1724 = sld [smem:[#allocation11 + $0xb]]
        %v1725 = vstv %s1724
        %v1726 = vmul.f32 %v1725, %v1642
        %v1727 = vmul.f32 %v1725, %v1643
        %1730 = vrot.lane.b32.xlu0 %v1726, 126
        %v1731 = vpop.permute.xlu0 %1730
        %1732 = vrot.lane.b32.xlu0 %v1727, 126
        %v1733 = vpop.permute.xlu0 %1732
        %v1736 = vadd.f32 %v1680, %v1731
        %v1737 = vadd.f32 %v1681, %v1733
        %s1738 = sld [smem:[#allocation11 + $0x1d]]
        %v1739 = vstv %s1738
        %v1740 = vmul.f32 %v1739, %v1642
        %v1741 = vmul.f32 %v1739, %v1643
        %1744 = vrot.lane.b32.xlu0 %v1740, 126
        %v1745 = vpop.permute.xlu0 %1744
        %1746 = vrot.lane.b32.xlu0 %v1741, 126
        %v1747 = vpop.permute.xlu0 %1746
        %v1750 = vadd.f32 %v1694, %v1745
        %v1751 = vadd.f32 %v1695, %v1747
        %s1752 = sld [smem:[#allocation11 + $0x2f]]
        %v1753 = vstv %s1752
        %v1754 = vmul.f32 %v1753, %v1642
        %v1755 = vmul.f32 %v1753, %v1643
        %1758 = vrot.lane.b32.xlu0 %v1754, 126
        %v1759 = vpop.permute.xlu0 %1758
        %1760 = vrot.lane.b32.xlu0 %v1755, 126
        %v1761 = vpop.permute.xlu0 %1760
        %v1764 = vadd.f32 %v1708, %v1759
        %v1765 = vadd.f32 %v1709, %v1761
        %s1766 = sld [smem:[#allocation11 + $0x41]]
        %v1767 = vstv %s1766
        %v1768 = vmul.f32 %v1767, %v1642
        %v1769 = vmul.f32 %v1767, %v1643
        %1772 = vrot.lane.b32.xlu0 %v1768, 126
        %v1773 = vpop.permute.xlu0 %1772
        %1774 = vrot.lane.b32.xlu0 %v1769, 126
        %v1775 = vpop.permute.xlu0 %1774
        %v1778 = vadd.f32 %v1722, %v1773
        %v1779 = vadd.f32 %v1723, %v1775
        %v1780 = vld [vmem:[%s1210 + $0x1] sm:$0xff]
        %v1781 = vld [vmem:[%s1210 + $0x9] sm:$0xff]
        %s1782 = sld [smem:[#allocation11 + $0xc]]
        %v1783 = vstv %s1782
        %v1784 = vmul.f32 %v1783, %v1780
        %v1785 = vmul.f32 %v1783, %v1781
        %v1786 = vadd.f32 %v1736, %v1784
        %v1787 = vadd.f32 %v1737, %v1785
        %s1788 = sld [smem:[#allocation11 + $0x1e]]
        %v1789 = vstv %s1788
        %v1790 = vmul.f32 %v1789, %v1780
        %v1791 = vmul.f32 %v1789, %v1781
        %v1792 = vadd.f32 %v1750, %v1790
        %v1793 = vadd.f32 %v1751, %v1791
        %s1794 = sld [smem:[#allocation11 + $0x30]]
        %v1795 = vstv %s1794
        %v1796 = vmul.f32 %v1795, %v1780
        %v1797 = vmul.f32 %v1795, %v1781
        %v1798 = vadd.f32 %v1764, %v1796
        %v1799 = vadd.f32 %v1765, %v1797
        %s1800 = sld [smem:[#allocation11 + $0x42]]
        %v1801 = vstv %s1800
        %v1802 = vmul.f32 %v1801, %v1780
        %v1803 = vmul.f32 %v1801, %v1781
        %v1804 = vadd.f32 %v1778, %v1802
        %v1805 = vadd.f32 %v1779, %v1803
        %s1806 = sld [smem:[#allocation11 + $0xd]]
        %v1807 = vstv %s1806
        %v1808 = vmul.f32 %v1807, %v1780
        %v1809 = vmul.f32 %v1807, %v1781
        %1812 = vrot.lane.b32.xlu0 %v1808, 127
        %v1813 = vpop.permute.xlu0 %1812
        %1814 = vrot.lane.b32.xlu0 %v1809, 127
        %v1815 = vpop.permute.xlu0 %1814
        %v1818 = vadd.f32 %v1786, %v1813
        %v1819 = vadd.f32 %v1787, %v1815
        %s1820 = sld [smem:[#allocation11 + $0x1f]]
        %v1821 = vstv %s1820
        %v1822 = vmul.f32 %v1821, %v1780
        %v1823 = vmul.f32 %v1821, %v1781
        %1826 = vrot.lane.b32.xlu0 %v1822, 127
        %v1827 = vpop.permute.xlu0 %1826
        %1828 = vrot.lane.b32.xlu0 %v1823, 127
        %v1829 = vpop.permute.xlu0 %1828
        %v1832 = vadd.f32 %v1792, %v1827
        %v1833 = vadd.f32 %v1793, %v1829
        %s1834 = sld [smem:[#allocation11 + $0x31]]
        %v1835 = vstv %s1834
        %v1836 = vmul.f32 %v1835, %v1780
        %v1837 = vmul.f32 %v1835, %v1781
        %1840 = vrot.lane.b32.xlu0 %v1836, 127
        %v1841 = vpop.permute.xlu0 %1840
        %1842 = vrot.lane.b32.xlu0 %v1837, 127
        %v1843 = vpop.permute.xlu0 %1842
        %v1846 = vadd.f32 %v1798, %v1841
        %v1847 = vadd.f32 %v1799, %v1843
        %s1848 = sld [smem:[#allocation11 + $0x43]]
        %v1849 = vstv %s1848
        %v1850 = vmul.f32 %v1849, %v1780
        %v1851 = vmul.f32 %v1849, %v1781
        %1854 = vrot.lane.b32.xlu0 %v1850, 127
        %v1855 = vpop.permute.xlu0 %1854
        %1856 = vrot.lane.b32.xlu0 %v1851, 127
        %v1857 = vpop.permute.xlu0 %1856
        %v1860 = vadd.f32 %v1804, %v1855
        %v1861 = vadd.f32 %v1805, %v1857
        %s1862 = sld [smem:[#allocation11 + $0xe]]
        %v1863 = vstv %s1862
        %v1864 = vmul.f32 %v1863, %v1780
        %v1865 = vmul.f32 %v1863, %v1781
        %1868 = vrot.lane.b32.xlu0 %v1864, 126
        %v1869 = vpop.permute.xlu0 %1868
        %1870 = vrot.lane.b32.xlu0 %v1865, 126
        %v1871 = vpop.permute.xlu0 %1870
        %v1874 = vadd.f32 %v1818, %v1869
        %v1875 = vadd.f32 %v1819, %v1871
        %s1876 = sld [smem:[#allocation11 + $0x20]]
        %v1877 = vstv %s1876
        %v1878 = vmul.f32 %v1877, %v1780
        %v1879 = vmul.f32 %v1877, %v1781
        %1882 = vrot.lane.b32.xlu0 %v1878, 126
        %v1883 = vpop.permute.xlu0 %1882
        %1884 = vrot.lane.b32.xlu0 %v1879, 126
        %v1885 = vpop.permute.xlu0 %1884
        %v1888 = vadd.f32 %v1832, %v1883
        %v1889 = vadd.f32 %v1833, %v1885
        %s1890 = sld [smem:[#allocation11 + $0x32]]
        %v1891 = vstv %s1890
        %v1892 = vmul.f32 %v1891, %v1780
        %v1893 = vmul.f32 %v1891, %v1781
        %1896 = vrot.lane.b32.xlu0 %v1892, 126
        %v1897 = vpop.permute.xlu0 %1896
        %1898 = vrot.lane.b32.xlu0 %v1893, 126
        %v1899 = vpop.permute.xlu0 %1898
        %v1902 = vadd.f32 %v1846, %v1897
        %v1903 = vadd.f32 %v1847, %v1899
        %s1904 = sld [smem:[#allocation11 + $0x44]]
        %v1905 = vstv %s1904
        %v1906 = vmul.f32 %v1905, %v1780
        %v1907 = vmul.f32 %v1905, %v1781
        %1910 = vrot.lane.b32.xlu0 %v1906, 126
        %v1911 = vpop.permute.xlu0 %1910
        %1912 = vrot.lane.b32.xlu0 %v1907, 126
        %v1913 = vpop.permute.xlu0 %1912
        %v1916 = vadd.f32 %v1860, %v1911
        %v1917 = vadd.f32 %v1861, %v1913
        %v1918 = vld [vmem:[%s1210 + $0x2] sm:$0xff]
        %v1919 = vld [vmem:[%s1210 + $0xa] sm:$0xff]
        %s1920 = sld [smem:[#allocation11 + $0xf]]
        %v1921 = vstv %s1920
        %v1922 = vmul.f32 %v1921, %v1918
        %v1923 = vmul.f32 %v1921, %v1919
        %v1924 = vadd.f32 %v1874, %v1922
        %v1925 = vadd.f32 %v1875, %v1923
        %s1926 = sld [smem:[#allocation11 + $0x21]]
        %v1927 = vstv %s1926
        %v1928 = vmul.f32 %v1927, %v1918
        %v1929 = vmul.f32 %v1927, %v1919
        %v1930 = vadd.f32 %v1888, %v1928
        %v1931 = vadd.f32 %v1889, %v1929
        %s1932 = sld [smem:[#allocation11 + $0x33]]
        %v1933 = vstv %s1932
        %v1934 = vmul.f32 %v1933, %v1918
        %v1935 = vmul.f32 %v1933, %v1919
        %v1936 = vadd.f32 %v1902, %v1934
        %v1937 = vadd.f32 %v1903, %v1935
        %s1938 = sld [smem:[#allocation11 + $0x45]]
        %v1939 = vstv %s1938
        %v1940 = vmul.f32 %v1939, %v1918
        %v1941 = vmul.f32 %v1939, %v1919
        %v1942 = vadd.f32 %v1916, %v1940
        %v1943 = vadd.f32 %v1917, %v1941
        %s1944 = sld [smem:[#allocation11 + $0x10]]
        %v1945 = vstv %s1944
        %v1946 = vmul.f32 %v1945, %v1918
        %v1947 = vmul.f32 %v1945, %v1919
        %1950 = vrot.lane.b32.xlu0 %v1946, 127
        %v1951 = vpop.permute.xlu0 %1950
        %1952 = vrot.lane.b32.xlu0 %v1947, 127
        %v1953 = vpop.permute.xlu0 %1952
        %v1956 = vadd.f32 %v1924, %v1951
        %v1957 = vadd.f32 %v1925, %v1953
        %s1958 = sld [smem:[#allocation11 + $0x22]]
        %v1959 = vstv %s1958
        %v1960 = vmul.f32 %v1959, %v1918
        %v1961 = vmul.f32 %v1959, %v1919
        %1964 = vrot.lane.b32.xlu0 %v1960, 127
        %v1965 = vpop.permute.xlu0 %1964
        %1966 = vrot.lane.b32.xlu0 %v1961, 127
        %v1967 = vpop.permute.xlu0 %1966
        %v1970 = vadd.f32 %v1930, %v1965
        %v1971 = vadd.f32 %v1931, %v1967
        %s1972 = sld [smem:[#allocation11 + $0x34]]
        %v1973 = vstv %s1972
        %v1974 = vmul.f32 %v1973, %v1918
        %v1975 = vmul.f32 %v1973, %v1919
        %1978 = vrot.lane.b32.xlu0 %v1974, 127
        %v1979 = vpop.permute.xlu0 %1978
        %1980 = vrot.lane.b32.xlu0 %v1975, 127
        %v1981 = vpop.permute.xlu0 %1980
        %v1984 = vadd.f32 %v1936, %v1979
        %v1985 = vadd.f32 %v1937, %v1981
        %s1986 = sld [smem:[#allocation11 + $0x46]]
        %v1987 = vstv %s1986
        %v1988 = vmul.f32 %v1987, %v1918
        %v1989 = vmul.f32 %v1987, %v1919
        %1992 = vrot.lane.b32.xlu0 %v1988, 127
        %v1993 = vpop.permute.xlu0 %1992
        %1994 = vrot.lane.b32.xlu0 %v1989, 127
        %v1995 = vpop.permute.xlu0 %1994
        %v1998 = vadd.f32 %v1942, %v1993
        %v1999 = vadd.f32 %v1943, %v1995
        %s2000 = sld [smem:[#allocation11 + $0x11]]
        %v2001 = vstv %s2000
        %v2002 = vmul.f32 %v2001, %v1918
        %v2003 = vmul.f32 %v2001, %v1919
        %2006 = vrot.lane.b32.xlu0 %v2002, 126
        %v2007 = vpop.permute.xlu0 %2006
        %2008 = vrot.lane.b32.xlu0 %v2003, 126
        %v2009 = vpop.permute.xlu0 %2008
        %v2012 = vadd.f32 %v1956, %v2007
        %v2013 = vadd.f32 %v1957, %v2009
        %s2014 = sld [smem:[#allocation11 + $0x23]]
        %v2015 = vstv %s2014
        %v2016 = vmul.f32 %v2015, %v1918
        %v2017 = vmul.f32 %v2015, %v1919
        %2020 = vrot.lane.b32.xlu0 %v2016, 126
        %v2021 = vpop.permute.xlu0 %2020
        %2022 = vrot.lane.b32.xlu0 %v2017, 126
        %v2023 = vpop.permute.xlu0 %2022
        %v2026 = vadd.f32 %v1970, %v2021
        %v2027 = vadd.f32 %v1971, %v2023
        %s2028 = sld [smem:[#allocation11 + $0x35]]
        %v2029 = vstv %s2028
        %v2030 = vmul.f32 %v2029, %v1918
        %v2031 = vmul.f32 %v2029, %v1919
        %2034 = vrot.lane.b32.xlu0 %v2030, 126
        %v2035 = vpop.permute.xlu0 %2034
        %2036 = vrot.lane.b32.xlu0 %v2031, 126
        %v2037 = vpop.permute.xlu0 %2036
        %v2040 = vadd.f32 %v1984, %v2035
        %v2041 = vadd.f32 %v1985, %v2037
        %s2042 = sld [smem:[#allocation11 + $0x47]]
        %v2043 = vstv %s2042
        %v2044 = vmul.f32 %v2043, %v1918
        %v2045 = vmul.f32 %v2043, %v1919
        %2048 = vrot.lane.b32.xlu0 %v2044, 126
        %v2049 = vpop.permute.xlu0 %2048
        %2050 = vrot.lane.b32.xlu0 %v2045, 126
        %v2051 = vpop.permute.xlu0 %2050
        %v2054 = vadd.f32 %v1998, %v2049
        %v2055 = vadd.f32 %v1999, %v2051
        %v2056 = vsub.f32 0.0, %v2012
        %v2057 = vsub.f32 0.0, %v2013
        %v2058 = vmul.f32 %v2056, 1.442695
        %v2059 = vpow.pop %v2058
        %v2060 = vmul.f32 %v2057, 1.442695
        %v2061 = vpow.pop %v2060
        %v2062 = vadd.f32 %v2059, 1.0
        %v2063 = vadd.f32 %v2061, 1.0
        %v2064 = vrcp.pop %v2062
        %v2065 = vrcp.pop %v2063
        %v2066 = vmul.f32 %v2064, 2.0
        %v2067 = vmul.f32 %v2065, 2.0
        %v2068 = vsub.f32 %v2066, 1.0
        %v2069 = vsub.f32 %v2067, 1.0
        %v2070 = vld [vmem:[%s303] sm:$0xff]
        %v2071 = vld [vmem:[%s303 + $0x8] sm:$0xff]
        %v2072 = vmul.f32 %v2068, 1.442695
        %v2073 = vpow.pop %v2072
        %v2074 = vmul.f32 %v2069, 1.442695
        %v2075 = vpow.pop %v2074
        %v2076 = vmul.f32 %v2070, %v2073
        %v2077 = vmul.f32 %v2071, %v2075
        %v2078 = vadd.f32 %v2076, %v2040
        %v2079 = vadd.f32 %v2077, %v2041
        %s2080 = scalar_lea.vmem %s294, 32 [#allocation14]
        %2081 = vst.msk [vmem:[%s2080] sm:$0xff] %vm1199, %v2078
        %2082 = vst.msk [vmem:[%s2080 + $0x8] sm:$0xff] %vm1199, %v2079
        %v2083 = vsub.f32 0.0, %v2026
        %v2084 = vsub.f32 0.0, %v2027
        %v2085 = vmul.f32 %v2083, 1.442695
        %v2086 = vpow.pop %v2085
        %v2087 = vmul.f32 %v2084, 1.442695
        %v2088 = vpow.pop %v2087
        %v2089 = vadd.f32 %v2086, 1.0
        %v2090 = vadd.f32 %v2088, 1.0
        %v2091 = vrcp.pop %v2089
        %v2092 = vrcp.pop %v2090
        %v2093 = vmul.f32 %v2091, 2.0
        %v2094 = vmul.f32 %v2092, 2.0
        %v2095 = vsub.f32 %v2093, 1.0
        %v2096 = vsub.f32 %v2094, 1.0
        %s2097 = scalar_lea.vmem %s251, 48 [#allocation4]
        %v2098 = vld [vmem:[%s2097] sm:$0xff]
        %v2099 = vld [vmem:[%s2097 + $0x8] sm:$0xff]
        %v2100 = vmul.f32 %v2095, 1.442695
        %v2101 = vpow.pop %v2100
        %v2102 = vmul.f32 %v2096, 1.442695
        %v2103 = vpow.pop %v2102
        %v2104 = vmul.f32 %v2098, %v2101
        %v2105 = vmul.f32 %v2099, %v2103
        %v2106 = vadd.f32 %v2104, %v2054
        %v2107 = vadd.f32 %v2105, %v2055
        %s2108 = scalar_lea.vmem %s294, 48 [#allocation14]
        %2109 = vst.msk [vmem:[%s2108] sm:$0xff] %vm1199, %v2106
        %2110 = vst.msk [vmem:[%s2108 + $0x8] sm:$0xff] %vm1199, %v2107
        %s2111 = sand.u32 %s143, 1
        %s2112 = scalar_lea.sflag [#allocation6], %s2111
        %s2113 = sand.u32 %s143, 1
        %s2114 = smul.addr %s2113, 64
        %s2115 = scalar_lea.vmem [#allocation14], %s2114
        // Predicated region
        $region61: #{tpu_custom_call.1} parent=39 // pred_check
          %p2116 = pneg %p153
        $region62: #{tpu_custom_call.1} parent=39 // pred_check_branch
          %2118 = sbr.rel (%p2116) target = $region64
        $region63: #{tpu_custom_call.1} parent=39 // pred_region
          %s2120 = ssub.s32 1024, 1024
          %2121 = vsyncadd %s2112, %s2120
          %s2122 = smul.addr %s25, 8
          %s2123 = smul.addr %s2122, 128
          %s2124 = scalar_lea.hbm %s5, %s2123
          %s2125 = sshll.u32 %s2115, 4
          %s2126 = int_to_ptr.vmem [resolvable:$true] %s2125
          %2131 = dma.vmem_to_hbm [thread:$0]  %s2126, 1024, %s2124, %s2112, 128, 128, 8
        $region64: #{tpu_custom_call.1} parent=39 // pred_fallthru
          _
      $region40: #{tpu_custom_call.1} parent=5 // pred_fallthru
        _
      %p2132 = scmp.le.s32.totalorder 2, %s20
      // Predicated region
      $region65: #{tpu_custom_call.1} parent=5 // pred_check
        %p2133 = pneg %p2132
      $region66: #{tpu_custom_call.1} parent=5 // pred_check_branch
        %2135 = sbr.rel (%p2133) target = $region68
      $region67: #{tpu_custom_call.1} parent=5 // pred_region
        %s2136 = ssub.s32 %s20, 2
        // Predicated region
        $region69: #{tpu_custom_call.1} parent=67 // pred_check
          %p2137 = pneg %p159
        $region70: #{tpu_custom_call.1} parent=67 // pred_check_branch
          %2139 = sbr.rel (%p2137) target = $region72
        $region71: #{tpu_custom_call.1} parent=67 // pred_region
          %s2140 = sand.u32 %s144, 1
          %s2141 = scalar_lea.sflag [#allocation6], %s2140
          %s2142 = sand.u32 %s144, 1
          %s2143 = smul.addr %s2142, 64
          %s2144 = scalar_lea.vmem [#allocation14], %s2143
          %2145 = dma.done %s2141, 1024
        $region72: #{tpu_custom_call.1} parent=67 // pred_fallthru
          _
      $region68: #{tpu_custom_call.1} parent=5 // pred_fallthru
        _
    $region6: #{tpu_custom_call.1} parent=1 // loop_footer
      %s24 = sadd.s32 1, %s20
    $region7: #{tpu_custom_call.1} parent=1 // loop_footer_branch
      %19 = sbr.rel target = $region3
    $region8: #{tpu_custom_call.1} parent=1 // loop_exit
      _
    %2146 = vsyncpa [#allocation5], 1
    %s2147 = scalar_lea.sflag [#allocation5], 1
    %2148 = vsyncpa %s2147, 1
    %2149 = vsyncpa [#allocation6], 1
    %s2150 = scalar_lea.sflag [#allocation6], 1
    %2151 = vsyncpa %s2150, 1
    %2152 = vsyncpa [#allocation7], 1
    %s2153 = scalar_lea.sflag [#allocation7], 1
    %2154 = vsyncpa %s2153, 1
    %2155 = vsyncpa [#allocation10], 1
    %2156 = vsyncpa [#allocation13], 1

</llo_original>
